<compile_context>
chip_gen: v6e
topology: v6e:2x2x1
jax: 0.10.0
libtpu: 0.0.40
codegen_flags: <defaults>
</compile_context>

<pallas_src>
import jax
import jax.numpy as jnp
from jax.experimental import pallas as pl
from jax.experimental.pallas import tpu as pltpu

GENE_DIM = 12
NUM_CLASSES = 2
HIDDEN = (64, 32, 16, 8)
DIMS = (GENE_DIM,) + HIDDEN + (NUM_CLASSES,)
NUM_LAYERS = len(DIMS) - 1           # 4 GCN convs + 1 linear classifier
LANE = 128                           # pad every feature axis to the TPU lane width

NODES_PER_GRAPH = 16                 # N per graph in this demo
GRAPHS_PER_TILE = LANE // NODES_PER_GRAPH   # 8 graphs per grid step
TILE_ROWS = GRAPHS_PER_TILE * NODES_PER_GRAPH  # 128 rows per tile
assert TILE_ROWS == LANE


# --------------------------------------------------------------------- kernel


def gcn_kernel(adj_ref, x_ref, w_ref, b_ref, out_ref):
    """Fused forward over one tile of GRAPHS_PER_TILE graphs.

    adj_ref: [1, TILE_ROWS, TILE_ROWS]  block-diagonal normalized adjacencies (f32)
    x_ref:   [1, TILE_ROWS, LANE]       node features, lanes >= GENE_DIM are zero (f32)
    w_ref:   [NUM_LAYERS, LANE, LANE]   zero-padded layer weights (bf16, VMEM-resident)
    b_ref:   [8, LANE]                  zero-padded layer biases (f32, rows 0..4 used)
    out_ref: [1, TILE_ROWS, LANE]       lane-dense output (classes in cols 0..1)
    """
    adj = adj_ref[0]                 # [128, 128] f32
    h = x_ref[0]                     # [128, 128] f32

    for l in range(NUM_LAYERS - 1):
        w = w_ref[l]                             # [128, 128] bf16
        b = b_ref[l:l + 1, :]                    # [1, 128]   f32
        # Feature transform: full-width M=128 bf16 matmul, f32 accumulate.
        xw = jnp.dot(h.astype(jnp.bfloat16), w,
                     preferred_element_type=jnp.float32)
        # Aggregation: block-diagonal Ahat keeps graphs independent.
        agg = jnp.dot(adj, xw, preferred_element_type=jnp.float32)
        h = jnp.tanh(agg + b)                    # bias + tanh stay f32 (v5e-safe)

    # Classifier: plain Linear (no aggregation, no tanh). Lane-dense store.
    wc = w_ref[NUM_LAYERS - 1]
    bc = b_ref[NUM_LAYERS - 1:NUM_LAYERS, :]
    out_ref[0] = jnp.dot(h.astype(jnp.bfloat16), wc,
                         preferred_element_type=jnp.float32) + bc


@jax.jit
def gcn_forward(adj_tiles, x_tiles, w_slab, b_slab):
    num_tiles, tile_rows, _ = adj_tiles.shape
    out_tiles = pl.pallas_call(
        gcn_kernel,
        out_shape=jax.ShapeDtypeStruct((num_tiles, tile_rows, LANE), jnp.float32),
        grid=(num_tiles,),
        in_specs=[
            # Per-tile operands: indexed by the batch-tile id.
            pl.BlockSpec((1, tile_rows, tile_rows), lambda t: (t, 0, 0)),
            pl.BlockSpec((1, tile_rows, LANE), lambda t: (t, 0, 0)),
            # Weights / biases: constant index_map -> DMA'd once, VMEM-resident.
            pl.BlockSpec((NUM_LAYERS, LANE, LANE), lambda t: (0, 0, 0)),
            pl.BlockSpec((8, LANE), lambda t: (0, 0)),
        ],
        out_specs=pl.BlockSpec((1, tile_rows, LANE), lambda t: (t, 0, 0)),
        compiler_params=pltpu.CompilerParams(
            dimension_semantics=("parallel",)),   # splits tiles across v7x's 2 TCs
    )(adj_tiles, x_tiles, w_slab, b_slab)

    num_graphs = num_tiles * (tile_rows // NODES_PER_GRAPH)
    out = out_tiles.reshape(num_graphs, NODES_PER_GRAPH, LANE)
    return out[:, :, :NUM_CLASSES]


# ----------------------------- host-side setup (built once per batch/model) --


def build_norm_adj(edge_index, n):
    """Dense GCN normalization: Ahat = D^-1/2 (A + I) D^-1/2.

    Self-loops are added only for nodes that lack one (matching PyG
    add_remaining_self_loops).  The edge list must be bidirectional so the
    in-degree normalization matches PyG's symmetric gcn_norm.
    """
    src = edge_index[0]
    dst = edge_index[1]
    a = jnp.zeros((n, n), jnp.float32).at[dst, src].set(1.0)
    diag = jnp.diagonal(a)
    a = a + jnp.diag(jnp.where(diag > 0, 0.0, 1.0))
    # Symmetry check (review feedback): required for in-degree == out-degree.
    assert bool(jnp.all(a == a.T)), "edge_index must be bidirectional"
    deg = a.sum(axis=1)
    dinv = jnp.where(deg > 0, 1.0 / jnp.sqrt(deg), 0.0)
    return dinv[:, None] * a * dinv[None, :]


def init_params(key):
    """Deterministic glorot-style weights and uniform biases (synthetic init)."""
    params = []
    for l in range(NUM_LAYERS):
        fan_in, fan_out = DIMS[l], DIMS[l + 1]
        key, wkey, bkey = jax.random.split(key, 3)
        wscale = jnp.sqrt(6.0 / (fan_in + fan_out))
        w = jax.random.uniform(wkey, (fan_in, fan_out), jnp.float32,
                               minval=-wscale, maxval=wscale)
        bscale = 1.0 / jnp.sqrt(fan_in)
        b = jax.random.uniform(bkey, (1, fan_out), jnp.float32,
                               minval=-bscale, maxval=bscale)
        params += [w, b]
    return params


def pack_params(params):
    """Pack per-layer (W, b) into one bf16 weight slab + one f32 bias slab."""
    w_slab = jnp.zeros((NUM_LAYERS, LANE, LANE), jnp.float32)
    b_slab = jnp.zeros((8, LANE), jnp.float32)      # sublane-padded; rows 0..4 used
    for l in range(NUM_LAYERS):
        w, b = params[2 * l], params[2 * l + 1]
        fan_in, fan_out = DIMS[l], DIMS[l + 1]
        w_slab = w_slab.at[l, :fan_in, :fan_out].set(w)
        b_slab = b_slab.at[l, :fan_out].set(b.reshape(-1))
    return w_slab.astype(jnp.bfloat16), b_slab


def pack_graph_tiles(adjs, xs):
    """Pack B graphs into tiles: block-diagonal adjacency + lane-padded features."""
    num_graphs = adjs.shape[0]
    assert num_graphs % GRAPHS_PER_TILE == 0
    num_tiles = num_graphs // GRAPHS_PER_TILE
    adj_tiles = jnp.zeros((num_tiles, TILE_ROWS, TILE_ROWS), jnp.float32)
    x_tiles = jnp.zeros((num_tiles, TILE_ROWS, LANE), jnp.float32)
    for t in range(num_tiles):
        for g in range(GRAPHS_PER_TILE):
            b = t * GRAPHS_PER_TILE + g
            r = g * NODES_PER_GRAPH
            adj_tiles = adj_tiles.at[t, r:r + NODES_PER_GRAPH,
                                     r:r + NODES_PER_GRAPH].set(adjs[b])
            x_tiles = x_tiles.at[t, r:r + NODES_PER_GRAPH, :GENE_DIM].set(xs[b])
    return adj_tiles, x_tiles


def gcn_reference(xs, adjs, params, *, mimic_kernel_precision):
    """Pure-JAX reference of the batched forward pass.

    mimic_kernel_precision=True  -> same bf16 weight/activation casts as the
                                    kernel (f32 accumulate): tight comparison.
    mimic_kernel_precision=False -> full-f32 module semantics: loose comparison.
    """
    hi = jax.lax.Precision.HIGHEST

    def feat_dot(h, w):
        if mimic_kernel_precision:
            return jnp.matmul(h.astype(jnp.bfloat16), w.astype(jnp.bfloat16),
                              preferred_element_type=jnp.float32)
        return jnp.matmul(h, w, precision=hi)

    h = xs.astype(jnp.float32)                       # [B, N, GENE_DIM]
    for l in range(NUM_LAYERS - 1):
        w, b = params[2 * l], params[2 * l + 1]
        xw = feat_dot(h, w)                          # [B, N, fan_out]
        agg = jnp.matmul(adjs, xw, precision=hi)     # per-graph aggregation
        h = jnp.tanh(agg + b)
    wc, bc = params[-2], params[-1]
    return feat_dot(h, wc) + bc


if __name__ == "__main__":
    key = jax.random.PRNGKey(0)
    N = NODES_PER_GRAPH
    NUM_TILES = 2
    B = NUM_TILES * GRAPHS_PER_TILE          # 16 graphs of 16 nodes each

    # Per-graph edge lists: bidirectional ring + a graph-dependent chord.
    idx = jnp.arange(N, dtype=jnp.int32)
    ring_fwd = jnp.stack([idx, (idx + 1) % N])
    ring_bwd = jnp.stack([(idx + 1) % N, idx])
    adjs = []
    for g in range(B):
        a_node = g % N
        b_node = (g + N // 2) % N
        chord = jnp.array([[a_node, b_node], [b_node, a_node]], dtype=jnp.int32)
        edge_index = jnp.concatenate([ring_fwd, ring_bwd, chord], axis=1)
        adjs.append(build_norm_adj(edge_index, N))
    adjs = jnp.stack(adjs)                   # [B, N, N]

    key, xkey = jax.random.split(key)
    xs = jax.random.normal(xkey, (B, N, GENE_DIM), jnp.float32)

    params = init_params(jax.random.PRNGKey(0))

    # Built once, outside the per-call hot path.
    w_slab, b_slab = pack_params(params)
    adj_tiles, x_tiles = pack_graph_tiles(adjs, xs)

    out = gcn_forward(adj_tiles, x_tiles, w_slab, b_slab)
    out = jax.block_until_ready(out)

    assert out.shape == (B, N, NUM_CLASSES)
    assert jnp.all(jnp.isfinite(out))

    # Tight check against a precision-matched reference (same bf16 casts).
    ref_matched = gcn_reference(xs, adjs, params, mimic_kernel_precision=True)
    err_matched = float(jnp.max(jnp.abs(out - ref_matched)))
    assert jnp.allclose(out, ref_matched, atol=1e-4, rtol=1e-4), err_matched

    # Sanity check against the full-f32 module semantics (bf16 weight rounding).
    ref_f32 = gcn_reference(xs, adjs, params, mimic_kernel_precision=False)
    err_f32 = float(jnp.max(jnp.abs(out - ref_f32)))
    assert jnp.allclose(out, ref_f32, atol=5e-2, rtol=5e-2), err_f32

    print("KERNEL_OK")
</pallas_src>

<mosaic_0001>
module attributes {stable_mosaic.version = 11 : i64} {
  func.func @gcn_kernel(%arg0: i32, %arg1: memref<1x128x128xf32, #tpu.memory_space<vmem>>, %arg2: memref<1x128x128xf32, #tpu.memory_space<vmem>>, %arg3: memref<5x128x128xbf16, #tpu.memory_space<vmem>>, %arg4: memref<8x128xf32, #tpu.memory_space<vmem>>, %arg5: memref<1x128x128xf32, #tpu.memory_space<vmem>>) attributes {dimension_semantics = [#tpu.dimension_semantics<parallel>], iteration_bounds = array<i64: 2>, scalar_prefetch = 0 : i64, scratch_operands = 0 : i64, tpu.core_type = #tpu.core_type<tc>, window_params = [{transform_indices = @transform_0, window_bounds = array<i64: 1, 128, 128>}, {transform_indices = @transform_1, window_bounds = array<i64: 1, 128, 128>}, {pipeline_mode = #tpu.pipeline_mode<synchronous>, transform_indices = @transform_2, window_bounds = array<i64: 5, 128, 128>}, {pipeline_mode = #tpu.pipeline_mode<synchronous>, transform_indices = @transform_3, window_bounds = array<i64: 8, 128>}, {transform_indices = @transform_4, window_bounds = array<i64: 1, 128, 128>}]} {
    %c0 = arith.constant 0 : index
    %c0_0 = arith.constant 0 : index
    %c0_1 = arith.constant 0 : index
    %0 = vector.load %arg1[%c0, %c0_0, %c0_1] : memref<1x128x128xf32, #tpu.memory_space<vmem>>, vector<1x128x128xf32>
    %1 = vector.shape_cast %0 : vector<1x128x128xf32> to vector<128x128xf32>
    %c0_2 = arith.constant 0 : index
    %c0_3 = arith.constant 0 : index
    %c0_4 = arith.constant 0 : index
    %2 = vector.load %arg2[%c0_2, %c0_3, %c0_4] : memref<1x128x128xf32, #tpu.memory_space<vmem>>, vector<1x128x128xf32>
    %3 = vector.shape_cast %2 : vector<1x128x128xf32> to vector<128x128xf32>
    %c0_5 = arith.constant 0 : index
    %c0_6 = arith.constant 0 : index
    %c0_7 = arith.constant 0 : index
    %4 = vector.load %arg3[%c0_5, %c0_6, %c0_7] : memref<5x128x128xbf16, #tpu.memory_space<vmem>>, vector<1x128x128xbf16>
    %5 = vector.shape_cast %4 : vector<1x128x128xbf16> to vector<128x128xbf16>
    %c0_8 = arith.constant 0 : index
    %c0_9 = arith.constant 0 : index
    %6 = vector.load %arg4[%c0_8, %c0_9] : memref<8x128xf32, #tpu.memory_space<vmem>>, vector<1x128xf32>
    %7 = arith.truncf %3 : vector<128x128xf32> to vector<128x128xbf16>
    %cst = arith.constant dense<0.000000e+00> : vector<128x128xf32>
    %8 = tpu.matmul %7, %5, %cst {dimension_numbers = #tpu.dot_dimension_numbers<[1], [0], [0], [1], [0, 0, 1, 1], [], []>} : vector<128x128xbf16>, vector<128x128xbf16>, vector<128x128xf32> -> vector<128x128xf32>
    %cst_10 = arith.constant dense<0.000000e+00> : vector<128x128xf32>
    %9 = tpu.matmul %1, %8, %cst_10 {dimension_numbers = #tpu.dot_dimension_numbers<[1], [0], [0], [1], [0, 0, 1, 1], [], []>} : vector<128x128xf32>, vector<128x128xf32>, vector<128x128xf32> -> vector<128x128xf32>
    %10 = vector.broadcast %6 : vector<1x128xf32> to vector<128x128xf32>
    %11 = arith.addf %9, %10 : vector<128x128xf32>
    %12 = math.tanh %11 : vector<128x128xf32>
    %c1 = arith.constant 1 : index
    %c0_11 = arith.constant 0 : index
    %c0_12 = arith.constant 0 : index
    %13 = vector.load %arg3[%c1, %c0_11, %c0_12] : memref<5x128x128xbf16, #tpu.memory_space<vmem>>, vector<1x128x128xbf16>
    %14 = vector.shape_cast %13 : vector<1x128x128xbf16> to vector<128x128xbf16>
    %c1_13 = arith.constant 1 : index
    %c0_14 = arith.constant 0 : index
    %15 = vector.load %arg4[%c1_13, %c0_14] : memref<8x128xf32, #tpu.memory_space<vmem>>, vector<1x128xf32>
    %16 = arith.truncf %12 : vector<128x128xf32> to vector<128x128xbf16>
    %cst_15 = arith.constant dense<0.000000e+00> : vector<128x128xf32>
    %17 = tpu.matmul %16, %14, %cst_15 {dimension_numbers = #tpu.dot_dimension_numbers<[1], [0], [0], [1], [0, 0, 1, 1], [], []>} : vector<128x128xbf16>, vector<128x128xbf16>, vector<128x128xf32> -> vector<128x128xf32>
    %cst_16 = arith.constant dense<0.000000e+00> : vector<128x128xf32>
    %18 = tpu.matmul %1, %17, %cst_16 {dimension_numbers = #tpu.dot_dimension_numbers<[1], [0], [0], [1], [0, 0, 1, 1], [], []>} : vector<128x128xf32>, vector<128x128xf32>, vector<128x128xf32> -> vector<128x128xf32>
    %19 = vector.broadcast %15 : vector<1x128xf32> to vector<128x128xf32>
    %20 = arith.addf %18, %19 : vector<128x128xf32>
    %21 = math.tanh %20 : vector<128x128xf32>
    %c2 = arith.constant 2 : index
    %c0_17 = arith.constant 0 : index
    %c0_18 = arith.constant 0 : index
    %22 = vector.load %arg3[%c2, %c0_17, %c0_18] : memref<5x128x128xbf16, #tpu.memory_space<vmem>>, vector<1x128x128xbf16>
    %23 = vector.shape_cast %22 : vector<1x128x128xbf16> to vector<128x128xbf16>
    %c2_19 = arith.constant 2 : index
    %c0_20 = arith.constant 0 : index
    %24 = vector.load %arg4[%c2_19, %c0_20] : memref<8x128xf32, #tpu.memory_space<vmem>>, vector<1x128xf32>
    %25 = arith.truncf %21 : vector<128x128xf32> to vector<128x128xbf16>
    %cst_21 = arith.constant dense<0.000000e+00> : vector<128x128xf32>
    %26 = tpu.matmul %25, %23, %cst_21 {dimension_numbers = #tpu.dot_dimension_numbers<[1], [0], [0], [1], [0, 0, 1, 1], [], []>} : vector<128x128xbf16>, vector<128x128xbf16>, vector<128x128xf32> -> vector<128x128xf32>
    %cst_22 = arith.constant dense<0.000000e+00> : vector<128x128xf32>
    %27 = tpu.matmul %1, %26, %cst_22 {dimension_numbers = #tpu.dot_dimension_numbers<[1], [0], [0], [1], [0, 0, 1, 1], [], []>} : vector<128x128xf32>, vector<128x128xf32>, vector<128x128xf32> -> vector<128x128xf32>
    %28 = vector.broadcast %24 : vector<1x128xf32> to vector<128x128xf32>
    %29 = arith.addf %27, %28 : vector<128x128xf32>
    %30 = math.tanh %29 : vector<128x128xf32>
    %c3 = arith.constant 3 : index
    %c0_23 = arith.constant 0 : index
    %c0_24 = arith.constant 0 : index
    %31 = vector.load %arg3[%c3, %c0_23, %c0_24] : memref<5x128x128xbf16, #tpu.memory_space<vmem>>, vector<1x128x128xbf16>
    %32 = vector.shape_cast %31 : vector<1x128x128xbf16> to vector<128x128xbf16>
    %c3_25 = arith.constant 3 : index
    %c0_26 = arith.constant 0 : index
    %33 = vector.load %arg4[%c3_25, %c0_26] : memref<8x128xf32, #tpu.memory_space<vmem>>, vector<1x128xf32>
    %34 = arith.truncf %30 : vector<128x128xf32> to vector<128x128xbf16>
    %cst_27 = arith.constant dense<0.000000e+00> : vector<128x128xf32>
    %35 = tpu.matmul %34, %32, %cst_27 {dimension_numbers = #tpu.dot_dimension_numbers<[1], [0], [0], [1], [0, 0, 1, 1], [], []>} : vector<128x128xbf16>, vector<128x128xbf16>, vector<128x128xf32> -> vector<128x128xf32>
    %cst_28 = arith.constant dense<0.000000e+00> : vector<128x128xf32>
    %36 = tpu.matmul %1, %35, %cst_28 {dimension_numbers = #tpu.dot_dimension_numbers<[1], [0], [0], [1], [0, 0, 1, 1], [], []>} : vector<128x128xf32>, vector<128x128xf32>, vector<128x128xf32> -> vector<128x128xf32>
    %37 = vector.broadcast %33 : vector<1x128xf32> to vector<128x128xf32>
    %38 = arith.addf %36, %37 : vector<128x128xf32>
    %39 = math.tanh %38 : vector<128x128xf32>
    %c4 = arith.constant 4 : index
    %c0_29 = arith.constant 0 : index
    %c0_30 = arith.constant 0 : index
    %40 = vector.load %arg3[%c4, %c0_29, %c0_30] : memref<5x128x128xbf16, #tpu.memory_space<vmem>>, vector<1x128x128xbf16>
    %41 = vector.shape_cast %40 : vector<1x128x128xbf16> to vector<128x128xbf16>
    %c4_31 = arith.constant 4 : index
    %c0_32 = arith.constant 0 : index
    %42 = vector.load %arg4[%c4_31, %c0_32] : memref<8x128xf32, #tpu.memory_space<vmem>>, vector<1x128xf32>
    %43 = arith.truncf %39 : vector<128x128xf32> to vector<128x128xbf16>
    %cst_33 = arith.constant dense<0.000000e+00> : vector<128x128xf32>
    %44 = tpu.matmul %43, %41, %cst_33 {dimension_numbers = #tpu.dot_dimension_numbers<[1], [0], [0], [1], [0, 0, 1, 1], [], []>} : vector<128x128xbf16>, vector<128x128xbf16>, vector<128x128xf32> -> vector<128x128xf32>
    %45 = vector.broadcast %42 : vector<1x128xf32> to vector<128x128xf32>
    %46 = arith.addf %44, %45 : vector<128x128xf32>
    %c0_34 = arith.constant 0 : index
    %c0_35 = arith.constant 0 : index
    %c0_36 = arith.constant 0 : index
    %47 = vector.load %arg5[%c0_34, %c0_35, %c0_36] : memref<1x128x128xf32, #tpu.memory_space<vmem>>, vector<1x128x128xf32>
    %48 = vector.shape_cast %47 : vector<1x128x128xf32> to vector<128x128xf32>
    %49 = vector.shape_cast %46 : vector<128x128xf32> to vector<1x128x128xf32>
    tpu.vector_store %arg5[%c0_34, %c0_35, %c0_36], %49 {strides = array<i32>} : memref<1x128x128xf32, #tpu.memory_space<vmem>>, vector<1x128x128xf32>,
    return
  }
  func.func @transform_0(%arg0: i32) -> (i32, i32, i32) {
    %c0_i32 = arith.constant 0 : i32
    %c0_i32_0 = arith.constant 0 : i32
    %c0_i32_1 = arith.constant 0 : i32
    return %arg0, %c0_i32, %c0_i32_0 : i32, i32, i32
  }
  func.func @transform_1(%arg0: i32) -> (i32, i32, i32) {
    %c0_i32 = arith.constant 0 : i32
    %c0_i32_0 = arith.constant 0 : i32
    %c0_i32_1 = arith.constant 0 : i32
    return %arg0, %c0_i32, %c0_i32_0 : i32, i32, i32
  }
  func.func @transform_2(%arg0: i32) -> (i32, i32, i32) {
    %c0_i32 = arith.constant 0 : i32
    %c0_i32_0 = arith.constant 0 : i32
    %c0_i32_1 = arith.constant 0 : i32
    %c0_i32_2 = arith.constant 0 : i32
    return %c0_i32, %c0_i32_0, %c0_i32_1 : i32, i32, i32
  }
  func.func @transform_3(%arg0: i32) -> (i32, i32) {
    %c0_i32 = arith.constant 0 : i32
    %c0_i32_0 = arith.constant 0 : i32
    %c0_i32_1 = arith.constant 0 : i32
    return %c0_i32, %c0_i32_0 : i32, i32
  }
  func.func @transform_4(%arg0: i32) -> (i32, i32, i32) {
    %c0_i32 = arith.constant 0 : i32
    %c0_i32_0 = arith.constant 0 : i32
    %c0_i32_1 = arith.constant 0 : i32
    return %arg0, %c0_i32, %c0_i32_0 : i32, i32, i32
  }
}

</mosaic_0001>

<llo_original>
// kernel: gcn_forward.1
$region0: #{gcn_forward.1}
  #allocation0 [shape = 'u32[]', space=smem, size = 0x4, offset = 0x4, fixed_abs, tag = 'smem constant byte address 0x4 - core index']
  #allocation1 [shape = 'u32[144,128]{1,0:T(1,128)}', space=vmem, size = 0x12000, scoped, tag = 'internal scratch']
  %s0 = inlined_call_operand.hbm [shape: f32[2,128,128], index: 0, kind: input, shape index: {}]
  %s1 = inlined_call_operand.hbm [shape: f32[2,128,128], index: 1, kind: input, shape index: {}]
  %s2 = inlined_call_operand.hbm [shape: bf16[5,128,128], index: 2, kind: input, shape index: {}]
  %s3 = inlined_call_operand.hbm [shape: f32[8,128], index: 3, kind: input, shape index: {}]
  %s4 = inlined_call_operand.vmem [shape: f32[2,128,128], index: 4, kind: output, shape index: {}]
  %s5 = sld [smem:[#allocation0]]
  $region65: #{gcn_forward.1} parent=0
    _
  %s7 = ssub.s32 1, %s5
  %s8 = scalar_select 0, %s7, %s5
  $region1: #{gcn_forward.1} parent=0
    #allocation2 [shape = 'u8[131072]{0}', space=vmem, size = 0x20000, scoped, tag = 'input window, operand 0']
    #allocation3 [shape = 's32[2]{0}', space=sflag, size = 0x8, scoped, tag = 'scoped memory for gcn_forward.1']
    #allocation4 [shape = 'u8[131072]{0}', space=vmem, size = 0x20000, scoped, tag = 'input window, operand 1']
    #allocation5 [shape = 's32[2]{0}', space=sflag, size = 0x8, scoped, tag = 'scoped memory for gcn_forward.1']
    #allocation6 [shape = 'u8[163840]{0}', space=vmem, size = 0x28000, scoped, tag = 'input window, operand 2, single buffered']
    #allocation7 [shape = 'u8[4096]{0}', space=vmem, size = 0x1000, scoped, tag = 'input window, operand 3, single buffered']
    #allocation8 [shape = 's32[1]{0}', space=sflag, size = 0x4, scoped, tag = 'scoped memory for gcn_forward.1']
    %9 = vsyncpa [#allocation3], 0
    %s10 = scalar_lea.sflag [#allocation3], 1
    %11 = vsyncpa %s10, 0
    %12 = vsyncpa [#allocation5], 0
    %s13 = scalar_lea.sflag [#allocation5], 1
    %14 = vsyncpa %s13, 0
    %15 = vsyncpa [#allocation8], 0
    loop: start=0, step=1, limit=4
    $region2: #{gcn_forward.1} parent=1 // loop_pre_header
      _
    $region3: #{gcn_forward.1} parent=1 // loop_header
      %s17 = sphi 0, %s21
      %p18 = scmp.ge.s32.totalorder %s17, 4
      %s27 = sphi 0, %s29
      %s30 = sphi 0, %s27
      %s31 = sphi 0, %s30
      %s47 = sphi 0, %s31
      %s53 = sphi 0, %s55
      %s56 = sphi 0, %s53
      %s57 = sphi 0, %s56
      %s73 = sphi 0, %s57
      %s77 = sphi 0, %s77
      %s79 = sphi 0, %s77
      %s80 = sphi 0, %s79
      %s94 = sphi 0, %s80
      %s98 = sphi 0, %s98
      %s100 = sphi 0, %s98
      %s101 = sphi 0, %s100
      %s115 = sphi 0, %s101
      %s121 = sphi 0, %s123
      %s124 = sphi 0, %s121
      %s125 = sphi 0, %s124
      %s141 = sphi 0, %s125
    $region4: #{gcn_forward.1} parent=1 // loop_header_branch
      %20 = sbr.rel (%p18) target = $region8
    $region5: #{gcn_forward.1} parent=1 // loop_body
      %s22 = ssub.s32 %s17, 1
      %s23 = ssub.s32 %s17, 2
      %s24 = sadd.s32 %s17, 1
      %s25 = ssub.s32 %s17, %s24
      %p26 = scmp.eq.s32.totalorder %s25, 0
      %s28 = sadd.s32 %s27, 1
      %s29 = scalar_select %p26, %s27, %s28
      %p32 = pneg %p26
      %p33 = scmp.eq.s32.totalorder %s17, 1
      %p34 = por %p32, %p33
      %p35 = scmp.ne.s32.totalorder %s27, %s30
      %p36 = scmp.eq.s32.totalorder %s17, 0
      %p37 = por %p35, %p36
      %p38 = scmp.ne.s32.totalorder %s27, %s30
      %p39 = scmp.eq.s32.totalorder %s22, 1
      %p40 = por %p38, %p39
      %p41 = scmp.ne.s32.totalorder %s30, %s31
      %p42 = scmp.eq.s32.totalorder %s22, 0
      %p43 = por %p41, %p42
      %p44 = scmp.ne.s32.totalorder %s30, %s31
      %p45 = scmp.eq.s32.totalorder %s23, 1
      %p46 = por %p44, %p45
      %p48 = scmp.ne.s32.totalorder %s31, %s47
      %p49 = scmp.eq.s32.totalorder %s23, 0
      %p50 = por %p48, %p49
      %s51 = ssub.s32 %s17, %s24
      %p52 = scmp.eq.s32.totalorder %s51, 0
      %s54 = sadd.s32 %s53, 1
      %s55 = scalar_select %p52, %s53, %s54
      %p58 = pneg %p52
      %p59 = scmp.eq.s32.totalorder %s17, 1
      %p60 = por %p58, %p59
      %p61 = scmp.ne.s32.totalorder %s53, %s56
      %p62 = scmp.eq.s32.totalorder %s17, 0
      %p63 = por %p61, %p62
      %p64 = scmp.ne.s32.totalorder %s53, %s56
      %p65 = scmp.eq.s32.totalorder %s22, 1
      %p66 = por %p64, %p65
      %p67 = scmp.ne.s32.totalorder %s56, %s57
      %p68 = scmp.eq.s32.totalorder %s22, 0
      %p69 = por %p67, %p68
      %p70 = scmp.ne.s32.totalorder %s56, %s57
      %p71 = scmp.eq.s32.totalorder %s23, 1
      %p72 = por %p70, %p71
      %p74 = scmp.ne.s32.totalorder %s57, %s73
      %p75 = scmp.eq.s32.totalorder %s23, 0
      %p76 = por %p74, %p75
      %s78 = sadd.s32 %s77, 1
      %p81 = scmp.eq.s32.totalorder %s17, 1
      %p82 = scmp.ne.s32.totalorder %s77, %s79
      %p83 = scmp.eq.s32.totalorder %s17, 0
      %p84 = por %p82, %p83
      %p85 = scmp.ne.s32.totalorder %s77, %s79
      %p86 = scmp.eq.s32.totalorder %s22, 1
      %p87 = por %p85, %p86
      %p88 = scmp.ne.s32.totalorder %s79, %s80
      %p89 = scmp.eq.s32.totalorder %s22, 0
      %p90 = por %p88, %p89
      %p91 = scmp.ne.s32.totalorder %s79, %s80
      %p92 = scmp.eq.s32.totalorder %s23, 1
      %p93 = por %p91, %p92
      %p95 = scmp.ne.s32.totalorder %s80, %s94
      %p96 = scmp.eq.s32.totalorder %s23, 0
      %p97 = por %p95, %p96
      %s99 = sadd.s32 %s98, 1
      %p102 = scmp.eq.s32.totalorder %s17, 1
      %p103 = scmp.ne.s32.totalorder %s98, %s100
      %p104 = scmp.eq.s32.totalorder %s17, 0
      %p105 = por %p103, %p104
      %p106 = scmp.ne.s32.totalorder %s98, %s100
      %p107 = scmp.eq.s32.totalorder %s22, 1
      %p108 = por %p106, %p107
      %p109 = scmp.ne.s32.totalorder %s100, %s101
      %p110 = scmp.eq.s32.totalorder %s22, 0
      %p111 = por %p109, %p110
      %p112 = scmp.ne.s32.totalorder %s100, %s101
      %p113 = scmp.eq.s32.totalorder %s23, 1
      %p114 = por %p112, %p113
      %p116 = scmp.ne.s32.totalorder %s101, %s115
      %p117 = scmp.eq.s32.totalorder %s23, 0
      %p118 = por %p116, %p117
      %s119 = ssub.s32 %s17, %s24
      %p120 = scmp.eq.s32.totalorder %s119, 0
      %s122 = sadd.s32 %s121, 1
      %s123 = scalar_select %p120, %s121, %s122
      %p126 = pneg %p120
      %p127 = scmp.eq.s32.totalorder %s17, 1
      %p128 = por %p126, %p127
      %p129 = scmp.ne.s32.totalorder %s121, %s124
      %p130 = scmp.eq.s32.totalorder %s17, 0
      %p131 = por %p129, %p130
      %p132 = scmp.ne.s32.totalorder %s121, %s124
      %p133 = scmp.eq.s32.totalorder %s22, 1
      %p134 = por %p132, %p133
      %p135 = scmp.ne.s32.totalorder %s124, %s125
      %p136 = scmp.eq.s32.totalorder %s22, 0
      %p137 = por %p135, %p136
      %p138 = scmp.ne.s32.totalorder %s124, %s125
      %p139 = scmp.eq.s32.totalorder %s23, 1
      %p140 = por %p138, %p139
      %p142 = scmp.ne.s32.totalorder %s125, %s141
      %p143 = scmp.eq.s32.totalorder %s23, 0
      %p144 = por %p142, %p143
      %p145 = scmp.le.s32.totalorder 1, %s17
      %p146 = scmp.lt.s32.totalorder %s17, 3
      %p147 = pnand %p145, %p146
      %p148 = pneg %p147
      // Predicated region
      $region9: #{gcn_forward.1} parent=5 // pred_check
        _
      $region10: #{gcn_forward.1} parent=5 // pred_check_branch
        %150 = sbr.rel (%p147) target = $region12
      $region11: #{gcn_forward.1} parent=5 // pred_region
        %s151 = ssub.s32 %s17, 1
        // Predicated region
        $region13: #{gcn_forward.1} parent=11 // pred_check
          %p152 = pneg %p90
        $region14: #{gcn_forward.1} parent=11 // pred_check_branch
          %154 = sbr.rel (%p152) target = $region16
        $region15: #{gcn_forward.1} parent=11 // pred_region
          %s156 = ssub.s32 5120, 5120
          %157 = vsyncadd [#allocation5], %s156
          %s158 = sshll.u32 [#allocation6], 4
          %s159 = int_to_ptr.vmem [resolvable:$true] %s158
          %164 = dma.hbm_to_vmem [thread:$0]  %s2, 5120, %s159, [#allocation5], 64, 64, 4
        $region16: #{gcn_forward.1} parent=11 // pred_fallthru
          _
        // Predicated region
        $region17: #{gcn_forward.1} parent=11 // pred_check
          %p165 = pneg %p111
        $region18: #{gcn_forward.1} parent=11 // pred_check_branch
          %167 = sbr.rel (%p165) target = $region20
        $region19: #{gcn_forward.1} parent=11 // pred_region
          %s169 = ssub.s32 128, 128
          %170 = vsyncadd [#allocation8], %s169
          %s172 = sshll.u32 [#allocation7], 4
          %s173 = int_to_ptr.vmem [resolvable:$true] %s172
          %175 = dma.hbm_to_vmem [thread:$0]  %s3, 128, %s173, [#allocation8]
        $region20: #{gcn_forward.1} parent=11 // pred_fallthru
          _
      $region12: #{gcn_forward.1} parent=5 // pred_fallthru
        _
      %p176 = scmp.lt.s32.totalorder %s17, 2
      // Predicated region
      $region21: #{gcn_forward.1} parent=5 // pred_check
        %p177 = pneg %p176
      $region22: #{gcn_forward.1} parent=5 // pred_check_branch
        %179 = sbr.rel (%p177) target = $region24
      $region23: #{gcn_forward.1} parent=5 // pred_region
        // Predicated region
        $region25: #{gcn_forward.1} parent=23 // pred_check
          %p180 = pneg %p37
        $region26: #{gcn_forward.1} parent=23 // pred_check_branch
          %182 = sbr.rel (%p180) target = $region28
        $region27: #{gcn_forward.1} parent=23 // pred_region
          %s183 = sand.u32 %s27, 1
          %s184 = scalar_lea.sflag [#allocation3], %s183
          %s185 = sand.u32 %s27, 1
          %s186 = smul.addr %s185, 128
          %s187 = scalar_lea.vmem [#allocation2], %s186
          %s189 = ssub.s32 2048, 2048
          %190 = vsyncadd %s184, %s189
          %s191 = smul.addr %s17, 16
          %s192 = smul.addr %s191, 128
          %s193 = scalar_lea.hbm %s0, %s192
          %s194 = sshll.u32 %s187, 4
          %s195 = int_to_ptr.vmem [resolvable:$true] %s194
          %200 = dma.hbm_to_vmem [thread:$0]  %s193, 2048, %s195, %s184, 128, 128, 8
        $region28: #{gcn_forward.1} parent=23 // pred_fallthru
          _
        // Predicated region
        $region29: #{gcn_forward.1} parent=23 // pred_check
          %p201 = pneg %p63
        $region30: #{gcn_forward.1} parent=23 // pred_check_branch
          %203 = sbr.rel (%p201) target = $region32
        $region31: #{gcn_forward.1} parent=23 // pred_region
          %s204 = sand.u32 %s17, 1
          %s205 = scalar_lea.sflag [#allocation5], %s204
          %s206 = sand.u32 %s53, 1
          %s207 = smul.addr %s206, 128
          %s208 = scalar_lea.vmem [#allocation4], %s207
          %s210 = ssub.s32 2048, 2048
          %211 = vsyncadd %s205, %s210
          %s212 = smul.addr %s17, 16
          %s213 = smul.addr %s212, 128
          %s214 = scalar_lea.hbm %s1, %s213
          %s215 = sshll.u32 %s208, 4
          %s216 = int_to_ptr.vmem [resolvable:$true] %s215
          %221 = dma.hbm_to_vmem [thread:$0]  %s214, 2048, %s216, %s205, 128, 128, 8
        $region32: #{gcn_forward.1} parent=23 // pred_fallthru
          _
      $region24: #{gcn_forward.1} parent=5 // pred_fallthru
        _
      %p222 = scmp.le.s32.totalorder 1, %s17
      %p223 = scmp.lt.s32.totalorder %s17, 3
      %p224 = pnand %p222, %p223
      %p225 = pneg %p224
      // Predicated region
      $region33: #{gcn_forward.1} parent=5 // pred_check
        _
      $region34: #{gcn_forward.1} parent=5 // pred_check_branch
        %227 = sbr.rel (%p224) target = $region36
      $region35: #{gcn_forward.1} parent=5 // pred_region
        %s228 = ssub.s32 %s17, 1
        %s229 = sand.u32 %s30, 1
        %s230 = scalar_lea.sflag [#allocation3], %s229
        %s231 = sand.u32 %s30, 1
        %s232 = smul.addr %s231, 128
        %s233 = scalar_lea.vmem [#allocation2], %s232
        // Predicated region
        $region37: #{gcn_forward.1} parent=35 // pred_check
          %p234 = pneg %p43
        $region38: #{gcn_forward.1} parent=35 // pred_check_branch
          %236 = sbr.rel (%p234) target = $region40
        $region39: #{gcn_forward.1} parent=35 // pred_region
          %237 = dma.done %s230, 2048
        $region40: #{gcn_forward.1} parent=35 // pred_fallthru
          _
        %s238 = sand.u32 %s22, 1
        %s239 = scalar_lea.sflag [#allocation5], %s238
        %s240 = sand.u32 %s56, 1
        %s241 = smul.addr %s240, 128
        %s242 = scalar_lea.vmem [#allocation4], %s241
        // Predicated region
        $region41: #{gcn_forward.1} parent=35 // pred_check
          %p243 = pneg %p69
        $region42: #{gcn_forward.1} parent=35 // pred_check_branch
          %245 = sbr.rel (%p243) target = $region44
        $region43: #{gcn_forward.1} parent=35 // pred_region
          %246 = dma.done %s239, 2048
        $region44: #{gcn_forward.1} parent=35 // pred_fallthru
          _
        // Predicated region
        $region45: #{gcn_forward.1} parent=35 // pred_check
          %p247 = pneg %p90
        $region46: #{gcn_forward.1} parent=35 // pred_check_branch
          %249 = sbr.rel (%p247) target = $region48
        $region47: #{gcn_forward.1} parent=35 // pred_region
          %250 = dma.done [#allocation5], 5120
        $region48: #{gcn_forward.1} parent=35 // pred_fallthru
          _
        // Predicated region
        $region49: #{gcn_forward.1} parent=35 // pred_check
          %p251 = pneg %p111
        $region50: #{gcn_forward.1} parent=35 // pred_check_branch
          %253 = sbr.rel (%p251) target = $region52
        $region51: #{gcn_forward.1} parent=35 // pred_region
          %254 = dma.done [#allocation8], 128
        $region52: #{gcn_forward.1} parent=35 // pred_fallthru
          _
        %s255 = sand.u32 %s30, 1
        %s256 = scalar_lea.sflag [#allocation3], %s255
        %s257 = sand.u32 %s30, 1
        %s258 = smul.addr %s257, 128
        %s259 = scalar_lea.vmem [#allocation2], %s258
        %p260 = pneg %p43
        %p261 = pneg %p40
        %s262 = sand.u32 %s22, 1
        %s263 = scalar_lea.sflag [#allocation5], %s262
        %s264 = sand.u32 %s56, 1
        %s265 = smul.addr %s264, 128
        %s266 = scalar_lea.vmem [#allocation4], %s265
        %p267 = pneg %p69
        %p268 = pneg %p66
        %p269 = pneg %p90
        %p270 = pneg %p87
        %p271 = pneg %p111
        %p272 = pneg %p108
        %p273 = pneg %p137
        %p274 = pneg %p134
        %p275 = scmp.lt.s32.totalorder %s22, 1
        %s276 = scalar_select %p275, %s22, 1
        %s277 = smul.addr %s276, 16
        %s278 = smul.addr %s277, 8
        %s279 = scalar_lea.vmem %s4, %s278
        %p280 = scmp.lt.s32.totalorder %s22, 1
        %s281 = scalar_select %p280, %s22, 1
        %s282 = smul.addr %s281, 16
        %s283 = smul.addr %s282, 8
        %s284 = scalar_lea.vmem %s4, %s283
        %v286 = vld [vmem:[%s233] sm:$0xff]
        %v287 = vld [vmem:[%s233 + $0x8] sm:$0xff]
        %v288 = vld [vmem:[%s233 + $0x10] sm:$0xff]
        %v289 = vld [vmem:[%s233 + $0x18] sm:$0xff]
        %v290 = vld [vmem:[%s233 + $0x20] sm:$0xff]
        %v291 = vld [vmem:[%s233 + $0x28] sm:$0xff]
        %v292 = vld [vmem:[%s233 + $0x30] sm:$0xff]
        %v293 = vld [vmem:[%s233 + $0x38] sm:$0xff]
        %v294 = vld [vmem:[%s233 + $0x40] sm:$0xff]
        %v295 = vld [vmem:[%s233 + $0x48] sm:$0xff]
        %v296 = vld [vmem:[%s233 + $0x50] sm:$0xff]
        %v297 = vld [vmem:[%s233 + $0x58] sm:$0xff]
        %v298 = vld [vmem:[%s233 + $0x60] sm:$0xff]
        %v299 = vld [vmem:[%s233 + $0x68] sm:$0xff]
        %v300 = vld [vmem:[%s233 + $0x70] sm:$0xff]
        %v301 = vld [vmem:[%s233 + $0x78] sm:$0xff]
        %v302 = vld [vmem:[%s242] sm:$0xff]
        %v303 = vld [vmem:[%s242 + $0x8] sm:$0xff]
        %v304 = vld [vmem:[%s242 + $0x10] sm:$0xff]
        %v305 = vld [vmem:[%s242 + $0x18] sm:$0xff]
        %v306 = vld [vmem:[%s242 + $0x20] sm:$0xff]
        %v307 = vld [vmem:[%s242 + $0x28] sm:$0xff]
        %v308 = vld [vmem:[%s242 + $0x30] sm:$0xff]
        %v309 = vld [vmem:[%s242 + $0x38] sm:$0xff]
        %v310 = vld [vmem:[%s242 + $0x40] sm:$0xff]
        %v311 = vld [vmem:[%s242 + $0x48] sm:$0xff]
        %v312 = vld [vmem:[%s242 + $0x50] sm:$0xff]
        %v313 = vld [vmem:[%s242 + $0x58] sm:$0xff]
        %v314 = vld [vmem:[%s242 + $0x60] sm:$0xff]
        %v315 = vld [vmem:[%s242 + $0x68] sm:$0xff]
        %v316 = vld [vmem:[%s242 + $0x70] sm:$0xff]
        %v317 = vld [vmem:[%s242 + $0x78] sm:$0xff]
        %v318 = vld [vmem:[#allocation6] sm:$0xf]
        %v319 = vld [vmem:[#allocation6 + $0x4] sm:$0xf]
        %v320 = vld [vmem:[#allocation6 + $0x8] sm:$0xf]
        %v321 = vld [vmem:[#allocation6 + $0xc] sm:$0xf]
        %v322 = vld [vmem:[#allocation6 + $0x10] sm:$0xf]
        %v323 = vld [vmem:[#allocation6 + $0x14] sm:$0xf]
        %v324 = vld [vmem:[#allocation6 + $0x18] sm:$0xf]
        %v325 = vld [vmem:[#allocation6 + $0x1c] sm:$0xf]
        %v326 = vld [vmem:[#allocation6 + $0x20] sm:$0xf]
        %v327 = vld [vmem:[#allocation6 + $0x24] sm:$0xf]
        %v328 = vld [vmem:[#allocation6 + $0x28] sm:$0xf]
        %v329 = vld [vmem:[#allocation6 + $0x2c] sm:$0xf]
        %v330 = vld [vmem:[#allocation6 + $0x30] sm:$0xf]
        %v331 = vld [vmem:[#allocation6 + $0x34] sm:$0xf]
        %v332 = vld [vmem:[#allocation6 + $0x38] sm:$0xf]
        %v333 = vld [vmem:[#allocation6 + $0x3c] sm:$0xf]
        %v334 = vld [vmem:[#allocation7] sm:$0x1]
        %v335 = vpack.c.bf16 %v303, %v302
        %v336 = vpack.c.bf16 %v305, %v304
        %v337 = vpack.c.bf16 %v307, %v306
        %v338 = vpack.c.bf16 %v309, %v308
        %v339 = vpack.c.bf16 %v311, %v310
        %v340 = vpack.c.bf16 %v313, %v312
        %v341 = vpack.c.bf16 %v315, %v314
        %v342 = vpack.c.bf16 %v317, %v316
        %v359 = vunpack.c.l.b16 %v318
        %v360 = vunpack.c.l.b16 %v319
        %v361 = vunpack.c.l.b16 %v320
        %v362 = vunpack.c.l.b16 %v321
        %v363 = vunpack.c.l.b16 %v322
        %v364 = vunpack.c.l.b16 %v323
        %v365 = vunpack.c.l.b16 %v324
        %v366 = vunpack.c.l.b16 %v325
        %v367 = vunpack.c.l.b16 %v326
        %v368 = vunpack.c.l.b16 %v327
        %v369 = vunpack.c.l.b16 %v328
        %v370 = vunpack.c.l.b16 %v329
        %v371 = vunpack.c.l.b16 %v330
        %v372 = vunpack.c.l.b16 %v331
        %v373 = vunpack.c.l.b16 %v332
        %v374 = vunpack.c.l.b16 %v333
        %v375 = vpack.c.b16 %v360, %v359
        %v376 = vpack.c.b16 %v362, %v361
        %v377 = vpack.c.b16 %v364, %v363
        %v378 = vpack.c.b16 %v366, %v365
        %v379 = vpack.c.b16 %v368, %v367
        %v380 = vpack.c.b16 %v370, %v369
        %v381 = vpack.c.b16 %v372, %v371
        %v382 = vpack.c.b16 %v374, %v373
        %391 = vmatprep.subr.bf16.mxu0 0
        %392 = vmatpush1.bf16.msra.mxu0 %v382
        %393 = vmatprep.subr.bf16.mxu0 0
        %394 = vmatpush1.bf16.msra.mxu0 %v381
        %395 = vmatprep.subr.bf16.mxu0 0
        %396 = vmatpush1.bf16.msra.mxu0 %v380
        %397 = vmatprep.subr.bf16.mxu0 0
        %398 = vmatpush1.bf16.msra.mxu0 %v379
        %399 = vmatprep.subr.bf16.mxu0 0
        %400 = vmatpush1.bf16.msra.mxu0 %v378
        %401 = vmatprep.subr.bf16.mxu0 0
        %402 = vmatpush1.bf16.msra.mxu0 %v377
        %403 = vmatprep.subr.bf16.mxu0 0
        %404 = vmatpush1.bf16.msra.mxu0 %v376
        %405 = vmatprep.subr.bf16.mxu0 0
        %406 = vmatpush1.bf16.msra.mxu0 %v375
        %407 = vmatprep.subr.bf16.mxu0 0
        %408 = vmatpush2.bf16.msra.mxu0 0
        %409 = vmatprep.subr.bf16.mxu0 0
        %410 = vmatpush2.bf16.msra.mxu0 0
        %411 = vmatprep.subr.bf16.mxu0 0
        %412 = vmatpush2.bf16.msra.mxu0 0
        %413 = vmatprep.subr.bf16.mxu0 0
        %414 = vmatpush2.bf16.msra.mxu0 0
        %415 = vmatprep.subr.bf16.mxu0 0
        %416 = vmatpush2.bf16.msra.mxu0 0
        %417 = vmatprep.subr.bf16.mxu0 0
        %418 = vmatpush2.bf16.msra.mxu0 0
        %419 = vmatprep.subr.bf16.mxu0 0
        %420 = vmatpush2.bf16.msra.mxu0 0
        %421 = vmatprep.subr.bf16.mxu0 0
        %422 = vmatpush2.bf16.msra.mxu0 0
        %423 = vmatprep.mubr.bf16.mxu0 0
        %424 = vmatmul.mubr.bf16.gmra.mxu0 %v335
        %v425 = vpop.f32.mrf.mxu0
        %v426 = vadd.f32 0.0, %v425
        %v427 = vpop.f32.mrf.mxu0
        %v428 = vpop.f32.mrf.mxu0
        %v429 = vadd.f32 0.0, %v428
        %v430 = vpop.f32.mrf.mxu0
        %431 = vmatprep.mubr.bf16.mxu0 0
        %432 = vmatmul.mubr.bf16.gmra.mxu0 %v336
        %v433 = vpop.f32.mrf.mxu0
        %v434 = vadd.f32 0.0, %v433
        %v435 = vpop.f32.mrf.mxu0
        %v436 = vpop.f32.mrf.mxu0
        %v437 = vadd.f32 0.0, %v436
        %v438 = vpop.f32.mrf.mxu0
        %439 = vmatprep.mubr.bf16.mxu0 0
        %440 = vmatmul.mubr.bf16.gmra.mxu0 %v337
        %v441 = vpop.f32.mrf.mxu0
        %v442 = vadd.f32 0.0, %v441
        %v443 = vpop.f32.mrf.mxu0
        %v444 = vpop.f32.mrf.mxu0
        %v445 = vadd.f32 0.0, %v444
        %v446 = vpop.f32.mrf.mxu0
        %447 = vmatprep.mubr.bf16.mxu0 0
        %448 = vmatmul.mubr.bf16.gmra.mxu0 %v338
        %v449 = vpop.f32.mrf.mxu0
        %v450 = vadd.f32 0.0, %v449
        %v451 = vpop.f32.mrf.mxu0
        %v452 = vpop.f32.mrf.mxu0
        %v453 = vadd.f32 0.0, %v452
        %v454 = vpop.f32.mrf.mxu0
        %455 = vmatprep.mubr.bf16.mxu0 0
        %456 = vmatmul.mubr.bf16.gmra.mxu0 %v339
        %v457 = vpop.f32.mrf.mxu0
        %v458 = vadd.f32 0.0, %v457
        %v459 = vpop.f32.mrf.mxu0
        %v460 = vpop.f32.mrf.mxu0
        %v461 = vadd.f32 0.0, %v460
        %v462 = vpop.f32.mrf.mxu0
        %463 = vmatprep.mubr.bf16.mxu0 0
        %464 = vmatmul.mubr.bf16.gmra.mxu0 %v340
        %v465 = vpop.f32.mrf.mxu0
        %v466 = vadd.f32 0.0, %v465
        %v467 = vpop.f32.mrf.mxu0
        %v468 = vpop.f32.mrf.mxu0
        %v469 = vadd.f32 0.0, %v468
        %v470 = vpop.f32.mrf.mxu0
        %471 = vmatprep.mubr.bf16.mxu0 0
        %472 = vmatmul.mubr.bf16.gmra.mxu0 %v341
        %v473 = vpop.f32.mrf.mxu0
        %v474 = vadd.f32 0.0, %v473
        %v475 = vpop.f32.mrf.mxu0
        %v476 = vpop.f32.mrf.mxu0
        %v477 = vadd.f32 0.0, %v476
        %v478 = vpop.f32.mrf.mxu0
        %479 = vmatprep.mubr.bf16.mxu0 0
        %480 = vmatmul.mubr.bf16.gmra.mxu0 %v342
        %v481 = vpop.f32.mrf.mxu0
        %v482 = vadd.f32 0.0, %v481
        %v483 = vpop.f32.mrf.mxu0
        %v484 = vpop.f32.mrf.mxu0
        %v485 = vadd.f32 0.0, %v484
        %v486 = vpop.f32.mrf.mxu0
        %487 = vdwg.mxu0
        %v488 = vlaneseq
        %v489 = vshrl.u32 %v488, 7
        %v490 = vsub.s32 0, %v489
        %v491 = vrot.slane %v334, %v490
        %492 = vmatprep.subr.mxu0 0.0
        %493 = vmatpush1.msra.mxu0 %v485
        %494 = vmatprep.subr.mxu0 0.0
        %495 = vmatpush1.msra.mxu0 %v482
        %496 = vmatprep.subr.mxu0 0.0
        %497 = vmatpush1.msra.mxu0 %v477
        %498 = vmatprep.subr.mxu0 0.0
        %499 = vmatpush1.msra.mxu0 %v474
        %500 = vmatprep.subr.mxu0 0.0
        %501 = vmatpush1.msra.mxu0 %v469
        %502 = vmatprep.subr.mxu0 0.0
        %503 = vmatpush1.msra.mxu0 %v466
        %504 = vmatprep.subr.mxu0 0.0
        %505 = vmatpush1.msra.mxu0 %v461
        %506 = vmatprep.subr.mxu0 0.0
        %507 = vmatpush1.msra.mxu0 %v458
        %508 = vmatprep.subr.mxu0 0.0
        %509 = vmatpush1.msra.mxu0 %v453
        %510 = vmatprep.subr.mxu0 0.0
        %511 = vmatpush1.msra.mxu0 %v450
        %512 = vmatprep.subr.mxu0 0.0
        %513 = vmatpush1.msra.mxu0 %v445
        %514 = vmatprep.subr.mxu0 0.0
        %515 = vmatpush1.msra.mxu0 %v442
        %516 = vmatprep.subr.mxu0 0.0
        %517 = vmatpush1.msra.mxu0 %v437
        %518 = vmatprep.subr.mxu0 0.0
        %519 = vmatpush1.msra.mxu0 %v434
        %520 = vmatprep.subr.mxu0 0.0
        %521 = vmatpush1.msra.mxu0 %v429
        %522 = vmatprep.subr.mxu0 0.0
        %523 = vmatpush1.msra.mxu0 %v426
        %524 = vmatprep.subr.mxu0 0.0
        %525 = vmatpush2.msra.mxu0 0.0
        %526 = vmatprep.subr.mxu0 0.0
        %527 = vmatpush2.msra.mxu0 0.0
        %528 = vmatprep.subr.mxu0 0.0
        %529 = vmatpush2.msra.mxu0 0.0
        %530 = vmatprep.subr.mxu0 0.0
        %531 = vmatpush2.msra.mxu0 0.0
        %532 = vmatprep.subr.mxu0 0.0
        %533 = vmatpush2.msra.mxu0 0.0
        %534 = vmatprep.subr.mxu0 0.0
        %535 = vmatpush2.msra.mxu0 0.0
        %536 = vmatprep.subr.mxu0 0.0
        %537 = vmatpush2.msra.mxu0 0.0
        %538 = vmatprep.subr.mxu0 0.0
        %539 = vmatpush2.msra.mxu0 0.0
        %540 = vmatprep.subr.mxu0 0.0
        %541 = vmatpush2.msra.mxu0 0.0
        %542 = vmatprep.subr.mxu0 0.0
        %543 = vmatpush2.msra.mxu0 0.0
        %544 = vmatprep.subr.mxu0 0.0
        %545 = vmatpush2.msra.mxu0 0.0
        %546 = vmatprep.subr.mxu0 0.0
        %547 = vmatpush2.msra.mxu0 0.0
        %548 = vmatprep.subr.mxu0 0.0
        %549 = vmatpush2.msra.mxu0 0.0
        %550 = vmatprep.subr.mxu0 0.0
        %551 = vmatpush2.msra.mxu0 0.0
        %552 = vmatprep.subr.mxu0 0.0
        %553 = vmatpush2.msra.mxu0 0.0
        %554 = vmatprep.subr.mxu0 0.0
        %555 = vmatpush2.msra.mxu0 0.0
        %556 = vmatprep.mubr.f32.mxu0 0.0
        %557 = vmatmul.mubr.f32.gmra.mxu0 %v286
        %v558 = vpop.f32.mrf.mxu0
        %v559 = vadd.f32 %v491, %v558
        %v560 = vpop.f32.mrf.mxu0
        %561 = vmatprep.mubr.f32.mxu0 0.0
        %562 = vmatmul.mubr.f32.gmra.mxu0 %v287
        %v563 = vpop.f32.mrf.mxu0
        %v564 = vadd.f32 %v491, %v563
        %v565 = vpop.f32.mrf.mxu0
        %566 = vmatprep.mubr.f32.mxu0 0.0
        %567 = vmatmul.mubr.f32.gmra.mxu0 %v288
        %v568 = vpop.f32.mrf.mxu0
        %v569 = vadd.f32 %v491, %v568
        %v570 = vpop.f32.mrf.mxu0
        %571 = vmatprep.mubr.f32.mxu0 0.0
        %572 = vmatmul.mubr.f32.gmra.mxu0 %v289
        %v573 = vpop.f32.mrf.mxu0
        %v574 = vadd.f32 %v491, %v573
        %v575 = vpop.f32.mrf.mxu0
        %576 = vmatprep.mubr.f32.mxu0 0.0
        %577 = vmatmul.mubr.f32.gmra.mxu0 %v290
        %v578 = vpop.f32.mrf.mxu0
        %v579 = vadd.f32 %v491, %v578
        %v580 = vpop.f32.mrf.mxu0
        %581 = vmatprep.mubr.f32.mxu0 0.0
        %582 = vmatmul.mubr.f32.gmra.mxu0 %v291
        %v583 = vpop.f32.mrf.mxu0
        %v584 = vadd.f32 %v491, %v583
        %v585 = vpop.f32.mrf.mxu0
        %586 = vmatprep.mubr.f32.mxu0 0.0
        %587 = vmatmul.mubr.f32.gmra.mxu0 %v292
        %v588 = vpop.f32.mrf.mxu0
        %v589 = vadd.f32 %v491, %v588
        %v590 = vpop.f32.mrf.mxu0
        %591 = vmatprep.mubr.f32.mxu0 0.0
        %592 = vmatmul.mubr.f32.gmra.mxu0 %v293
        %v593 = vpop.f32.mrf.mxu0
        %v594 = vadd.f32 %v491, %v593
        %v595 = vpop.f32.mrf.mxu0
        %596 = vmatprep.mubr.f32.mxu0 0.0
        %597 = vmatmul.mubr.f32.gmra.mxu0 %v294
        %v598 = vpop.f32.mrf.mxu0
        %v599 = vadd.f32 %v491, %v598
        %v600 = vpop.f32.mrf.mxu0
        %601 = vmatprep.mubr.f32.mxu0 0.0
        %602 = vmatmul.mubr.f32.gmra.mxu0 %v295
        %v603 = vpop.f32.mrf.mxu0
        %v604 = vadd.f32 %v491, %v603
        %v605 = vpop.f32.mrf.mxu0
        %606 = vmatprep.mubr.f32.mxu0 0.0
        %607 = vmatmul.mubr.f32.gmra.mxu0 %v296
        %v608 = vpop.f32.mrf.mxu0
        %v609 = vadd.f32 %v491, %v608
        %v610 = vpop.f32.mrf.mxu0
        %611 = vmatprep.mubr.f32.mxu0 0.0
        %612 = vmatmul.mubr.f32.gmra.mxu0 %v297
        %v613 = vpop.f32.mrf.mxu0
        %v614 = vadd.f32 %v491, %v613
        %v615 = vpop.f32.mrf.mxu0
        %616 = vmatprep.mubr.f32.mxu0 0.0
        %617 = vmatmul.mubr.f32.gmra.mxu0 %v298
        %v618 = vpop.f32.mrf.mxu0
        %v619 = vadd.f32 %v491, %v618
        %v620 = vpop.f32.mrf.mxu0
        %621 = vmatprep.mubr.f32.mxu0 0.0
        %622 = vmatmul.mubr.f32.gmra.mxu0 %v299
        %v623 = vpop.f32.mrf.mxu0
        %v624 = vadd.f32 %v491, %v623
        %v625 = vpop.f32.mrf.mxu0
        %626 = vmatprep.mubr.f32.mxu0 0.0
        %627 = vmatmul.mubr.f32.gmra.mxu0 %v300
        %v628 = vpop.f32.mrf.mxu0
        %v629 = vadd.f32 %v491, %v628
        %v630 = vpop.f32.mrf.mxu0
        %631 = vmatprep.mubr.f32.mxu0 0.0
        %632 = vmatmul.mubr.f32.gmra.mxu0 %v301
        %v633 = vpop.f32.mrf.mxu0
        %v634 = vadd.f32 %v491, %v633
        %v635 = vpop.f32.mrf.mxu0
        %636 = vdwg.mxu0
        %v637 = vtanh.pop %v559
        %v638 = vtanh.pop %v564
        %v639 = vtanh.pop %v569
        %v640 = vtanh.pop %v574
        %v641 = vtanh.pop %v579
        %v642 = vtanh.pop %v584
        %v643 = vtanh.pop %v589
        %v644 = vtanh.pop %v594
        %v645 = vtanh.pop %v599
        %v646 = vtanh.pop %v604
        %v647 = vtanh.pop %v609
        %v648 = vtanh.pop %v614
        %v649 = vtanh.pop %v619
        %v650 = vtanh.pop %v624
        %v651 = vtanh.pop %v629
        %v652 = vtanh.pop %v634
        %s653 = scalar_lea.vmem [#allocation6], 64
        %v654 = vld [vmem:[%s653] sm:$0xf]
        %v655 = vld [vmem:[%s653 + $0x4] sm:$0xf]
        %v656 = vld [vmem:[%s653 + $0x8] sm:$0xf]
        %v657 = vld [vmem:[%s653 + $0xc] sm:$0xf]
        %v658 = vld [vmem:[%s653 + $0x10] sm:$0xf]
        %v659 = vld [vmem:[%s653 + $0x14] sm:$0xf]
        %v660 = vld [vmem:[%s653 + $0x18] sm:$0xf]
        %v661 = vld [vmem:[%s653 + $0x1c] sm:$0xf]
        %v662 = vld [vmem:[%s653 + $0x20] sm:$0xf]
        %v663 = vld [vmem:[%s653 + $0x24] sm:$0xf]
        %v664 = vld [vmem:[%s653 + $0x28] sm:$0xf]
        %v665 = vld [vmem:[%s653 + $0x2c] sm:$0xf]
        %v666 = vld [vmem:[%s653 + $0x30] sm:$0xf]
        %v667 = vld [vmem:[%s653 + $0x34] sm:$0xf]
        %v668 = vld [vmem:[%s653 + $0x38] sm:$0xf]
        %v669 = vld [vmem:[%s653 + $0x3c] sm:$0xf]
        %v670 = vld [vmem:[#allocation7 + $0x1] sm:$0x1]
        %v671 = vpack.c.bf16 %v638, %v637
        %v672 = vpack.c.bf16 %v640, %v639
        %v673 = vpack.c.bf16 %v642, %v641
        %v674 = vpack.c.bf16 %v644, %v643
        %v675 = vpack.c.bf16 %v646, %v645
        %v676 = vpack.c.bf16 %v648, %v647
        %v677 = vpack.c.bf16 %v650, %v649
        %v678 = vpack.c.bf16 %v652, %v651
        %v695 = vunpack.c.l.b16 %v654
        %v696 = vunpack.c.l.b16 %v655
        %v697 = vunpack.c.l.b16 %v656
        %v698 = vunpack.c.l.b16 %v657
        %v699 = vunpack.c.l.b16 %v658
        %v700 = vunpack.c.l.b16 %v659
        %v701 = vunpack.c.l.b16 %v660
        %v702 = vunpack.c.l.b16 %v661
        %v703 = vunpack.c.l.b16 %v662
        %v704 = vunpack.c.l.b16 %v663
        %v705 = vunpack.c.l.b16 %v664
        %v706 = vunpack.c.l.b16 %v665
        %v707 = vunpack.c.l.b16 %v666
        %v708 = vunpack.c.l.b16 %v667
        %v709 = vunpack.c.l.b16 %v668
        %v710 = vunpack.c.l.b16 %v669
        %v711 = vpack.c.b16 %v696, %v695
        %v712 = vpack.c.b16 %v698, %v697
        %v713 = vpack.c.b16 %v700, %v699
        %v714 = vpack.c.b16 %v702, %v701
        %v715 = vpack.c.b16 %v704, %v703
        %v716 = vpack.c.b16 %v706, %v705
        %v717 = vpack.c.b16 %v708, %v707
        %v718 = vpack.c.b16 %v710, %v709
        %727 = vmatprep.subr.bf16.mxu0 0
        %728 = vmatpush1.bf16.msra.mxu0 %v718
        %729 = vmatprep.subr.bf16.mxu0 0
        %730 = vmatpush1.bf16.msra.mxu0 %v717
        %731 = vmatprep.subr.bf16.mxu0 0
        %732 = vmatpush1.bf16.msra.mxu0 %v716
        %733 = vmatprep.subr.bf16.mxu0 0
        %734 = vmatpush1.bf16.msra.mxu0 %v715
        %735 = vmatprep.subr.bf16.mxu0 0
        %736 = vmatpush1.bf16.msra.mxu0 %v714
        %737 = vmatprep.subr.bf16.mxu0 0
        %738 = vmatpush1.bf16.msra.mxu0 %v713
        %739 = vmatprep.subr.bf16.mxu0 0
        %740 = vmatpush1.bf16.msra.mxu0 %v712
        %741 = vmatprep.subr.bf16.mxu0 0
        %742 = vmatpush1.bf16.msra.mxu0 %v711
        %743 = vmatprep.subr.bf16.mxu0 0
        %744 = vmatpush2.bf16.msra.mxu0 0
        %745 = vmatprep.subr.bf16.mxu0 0
        %746 = vmatpush2.bf16.msra.mxu0 0
        %747 = vmatprep.subr.bf16.mxu0 0
        %748 = vmatpush2.bf16.msra.mxu0 0
        %749 = vmatprep.subr.bf16.mxu0 0
        %750 = vmatpush2.bf16.msra.mxu0 0
        %751 = vmatprep.subr.bf16.mxu0 0
        %752 = vmatpush2.bf16.msra.mxu0 0
        %753 = vmatprep.subr.bf16.mxu0 0
        %754 = vmatpush2.bf16.msra.mxu0 0
        %755 = vmatprep.subr.bf16.mxu0 0
        %756 = vmatpush2.bf16.msra.mxu0 0
        %757 = vmatprep.subr.bf16.mxu0 0
        %758 = vmatpush2.bf16.msra.mxu0 0
        %759 = vmatprep.mubr.bf16.mxu0 0
        %760 = vmatmul.mubr.bf16.gmra.mxu0 %v671
        %v761 = vpop.f32.mrf.mxu0
        %v762 = vadd.f32 0.0, %v761
        %v763 = vpop.f32.mrf.mxu0
        %v764 = vpop.f32.mrf.mxu0
        %v765 = vadd.f32 0.0, %v764
        %v766 = vpop.f32.mrf.mxu0
        %767 = vmatprep.mubr.bf16.mxu0 0
        %768 = vmatmul.mubr.bf16.gmra.mxu0 %v672
        %v769 = vpop.f32.mrf.mxu0
        %v770 = vadd.f32 0.0, %v769
        %v771 = vpop.f32.mrf.mxu0
        %v772 = vpop.f32.mrf.mxu0
        %v773 = vadd.f32 0.0, %v772
        %v774 = vpop.f32.mrf.mxu0
        %775 = vmatprep.mubr.bf16.mxu0 0
        %776 = vmatmul.mubr.bf16.gmra.mxu0 %v673
        %v777 = vpop.f32.mrf.mxu0
        %v778 = vadd.f32 0.0, %v777
        %v779 = vpop.f32.mrf.mxu0
        %v780 = vpop.f32.mrf.mxu0
        %v781 = vadd.f32 0.0, %v780
        %v782 = vpop.f32.mrf.mxu0
        %783 = vmatprep.mubr.bf16.mxu0 0
        %784 = vmatmul.mubr.bf16.gmra.mxu0 %v674
        %v785 = vpop.f32.mrf.mxu0
        %v786 = vadd.f32 0.0, %v785
        %v787 = vpop.f32.mrf.mxu0
        %v788 = vpop.f32.mrf.mxu0
        %v789 = vadd.f32 0.0, %v788
        %v790 = vpop.f32.mrf.mxu0
        %791 = vmatprep.mubr.bf16.mxu0 0
        %792 = vmatmul.mubr.bf16.gmra.mxu0 %v675
        %v793 = vpop.f32.mrf.mxu0
        %v794 = vadd.f32 0.0, %v793
        %v795 = vpop.f32.mrf.mxu0
        %v796 = vpop.f32.mrf.mxu0
        %v797 = vadd.f32 0.0, %v796
        %v798 = vpop.f32.mrf.mxu0
        %799 = vmatprep.mubr.bf16.mxu0 0
        %800 = vmatmul.mubr.bf16.gmra.mxu0 %v676
        %v801 = vpop.f32.mrf.mxu0
        %v802 = vadd.f32 0.0, %v801
        %v803 = vpop.f32.mrf.mxu0
        %v804 = vpop.f32.mrf.mxu0
        %v805 = vadd.f32 0.0, %v804
        %v806 = vpop.f32.mrf.mxu0
        %807 = vmatprep.mubr.bf16.mxu0 0
        %808 = vmatmul.mubr.bf16.gmra.mxu0 %v677
        %v809 = vpop.f32.mrf.mxu0
        %v810 = vadd.f32 0.0, %v809
        %v811 = vpop.f32.mrf.mxu0
        %v812 = vpop.f32.mrf.mxu0
        %v813 = vadd.f32 0.0, %v812
        %v814 = vpop.f32.mrf.mxu0
        %815 = vmatprep.mubr.bf16.mxu0 0
        %816 = vmatmul.mubr.bf16.gmra.mxu0 %v678
        %v817 = vpop.f32.mrf.mxu0
        %v818 = vadd.f32 0.0, %v817
        %v819 = vpop.f32.mrf.mxu0
        %v820 = vpop.f32.mrf.mxu0
        %v821 = vadd.f32 0.0, %v820
        %v822 = vpop.f32.mrf.mxu0
        %823 = vdwg.mxu0
        %v824 = vlaneseq
        %v825 = vshrl.u32 %v824, 7
        %v826 = vsub.s32 0, %v825
        %v827 = vrot.slane %v670, %v826
        %828 = vmatprep.subr.mxu0 0.0
        %829 = vmatpush1.msra.mxu0 %v821
        %830 = vmatprep.subr.mxu0 0.0
        %831 = vmatpush1.msra.mxu0 %v818
        %832 = vmatprep.subr.mxu0 0.0
        %833 = vmatpush1.msra.mxu0 %v813
        %834 = vmatprep.subr.mxu0 0.0
        %835 = vmatpush1.msra.mxu0 %v810
        %836 = vmatprep.subr.mxu0 0.0
        %837 = vmatpush1.msra.mxu0 %v805
        %838 = vmatprep.subr.mxu0 0.0
        %839 = vmatpush1.msra.mxu0 %v802
        %840 = vmatprep.subr.mxu0 0.0
        %841 = vmatpush1.msra.mxu0 %v797
        %842 = vmatprep.subr.mxu0 0.0
        %843 = vmatpush1.msra.mxu0 %v794
        %844 = vmatprep.subr.mxu0 0.0
        %845 = vmatpush1.msra.mxu0 %v789
        %846 = vmatprep.subr.mxu0 0.0
        %847 = vmatpush1.msra.mxu0 %v786
        %848 = vmatprep.subr.mxu0 0.0
        %849 = vmatpush1.msra.mxu0 %v781
        %850 = vmatprep.subr.mxu0 0.0
        %851 = vmatpush1.msra.mxu0 %v778
        %852 = vmatprep.subr.mxu0 0.0
        %853 = vmatpush1.msra.mxu0 %v773
        %854 = vmatprep.subr.mxu0 0.0
        %855 = vmatpush1.msra.mxu0 %v770
        %856 = vmatprep.subr.mxu0 0.0
        %857 = vmatpush1.msra.mxu0 %v765
        %858 = vmatprep.subr.mxu0 0.0
        %859 = vmatpush1.msra.mxu0 %v762
        %860 = vmatprep.subr.mxu0 0.0
        %861 = vmatpush2.msra.mxu0 0.0
        %862 = vmatprep.subr.mxu0 0.0
        %863 = vmatpush2.msra.mxu0 0.0
        %864 = vmatprep.subr.mxu0 0.0
        %865 = vmatpush2.msra.mxu0 0.0
        %866 = vmatprep.subr.mxu0 0.0
        %867 = vmatpush2.msra.mxu0 0.0
        %868 = vmatprep.subr.mxu0 0.0
        %869 = vmatpush2.msra.mxu0 0.0
        %870 = vmatprep.subr.mxu0 0.0
        %871 = vmatpush2.msra.mxu0 0.0
        %872 = vmatprep.subr.mxu0 0.0
        %873 = vmatpush2.msra.mxu0 0.0
        %874 = vmatprep.subr.mxu0 0.0
        %875 = vmatpush2.msra.mxu0 0.0
        %876 = vmatprep.subr.mxu0 0.0
        %877 = vmatpush2.msra.mxu0 0.0
        %878 = vmatprep.subr.mxu0 0.0
        %879 = vmatpush2.msra.mxu0 0.0
        %880 = vmatprep.subr.mxu0 0.0
        %881 = vmatpush2.msra.mxu0 0.0
        %882 = vmatprep.subr.mxu0 0.0
        %883 = vmatpush2.msra.mxu0 0.0
        %884 = vmatprep.subr.mxu0 0.0
        %885 = vmatpush2.msra.mxu0 0.0
        %886 = vmatprep.subr.mxu0 0.0
        %887 = vmatpush2.msra.mxu0 0.0
        %888 = vmatprep.subr.mxu0 0.0
        %889 = vmatpush2.msra.mxu0 0.0
        %890 = vmatprep.subr.mxu0 0.0
        %891 = vmatpush2.msra.mxu0 0.0
        %892 = vmatprep.mubr.f32.mxu0 0.0
        %893 = vmatmul.mubr.f32.gmra.mxu0 %v286
        %v894 = vpop.f32.mrf.mxu0
        %v895 = vadd.f32 %v827, %v894
        %v896 = vpop.f32.mrf.mxu0
        %897 = vmatprep.mubr.f32.mxu0 0.0
        %898 = vmatmul.mubr.f32.gmra.mxu0 %v287
        %v899 = vpop.f32.mrf.mxu0
        %v900 = vadd.f32 %v827, %v899
        %v901 = vpop.f32.mrf.mxu0
        %902 = vmatprep.mubr.f32.mxu0 0.0
        %903 = vmatmul.mubr.f32.gmra.mxu0 %v288
        %v904 = vpop.f32.mrf.mxu0
        %v905 = vadd.f32 %v827, %v904
        %v906 = vpop.f32.mrf.mxu0
        %907 = vmatprep.mubr.f32.mxu0 0.0
        %908 = vmatmul.mubr.f32.gmra.mxu0 %v289
        %v909 = vpop.f32.mrf.mxu0
        %v910 = vadd.f32 %v827, %v909
        %v911 = vpop.f32.mrf.mxu0
        %912 = vmatprep.mubr.f32.mxu0 0.0
        %913 = vmatmul.mubr.f32.gmra.mxu0 %v290
        %v914 = vpop.f32.mrf.mxu0
        %v915 = vadd.f32 %v827, %v914
        %v916 = vpop.f32.mrf.mxu0
        %917 = vmatprep.mubr.f32.mxu0 0.0
        %918 = vmatmul.mubr.f32.gmra.mxu0 %v291
        %v919 = vpop.f32.mrf.mxu0
        %v920 = vadd.f32 %v827, %v919
        %v921 = vpop.f32.mrf.mxu0
        %922 = vmatprep.mubr.f32.mxu0 0.0
        %923 = vmatmul.mubr.f32.gmra.mxu0 %v292
        %v924 = vpop.f32.mrf.mxu0
        %v925 = vadd.f32 %v827, %v924
        %v926 = vpop.f32.mrf.mxu0
        %927 = vmatprep.mubr.f32.mxu0 0.0
        %928 = vmatmul.mubr.f32.gmra.mxu0 %v293
        %v929 = vpop.f32.mrf.mxu0
        %v930 = vadd.f32 %v827, %v929
        %v931 = vpop.f32.mrf.mxu0
        %932 = vmatprep.mubr.f32.mxu0 0.0
        %933 = vmatmul.mubr.f32.gmra.mxu0 %v294
        %v934 = vpop.f32.mrf.mxu0
        %v935 = vadd.f32 %v827, %v934
        %v936 = vpop.f32.mrf.mxu0
        %937 = vmatprep.mubr.f32.mxu0 0.0
        %938 = vmatmul.mubr.f32.gmra.mxu0 %v295
        %v939 = vpop.f32.mrf.mxu0
        %v940 = vadd.f32 %v827, %v939
        %v941 = vpop.f32.mrf.mxu0
        %942 = vmatprep.mubr.f32.mxu0 0.0
        %943 = vmatmul.mubr.f32.gmra.mxu0 %v296
        %v944 = vpop.f32.mrf.mxu0
        %v945 = vadd.f32 %v827, %v944
        %v946 = vpop.f32.mrf.mxu0
        %947 = vmatprep.mubr.f32.mxu0 0.0
        %948 = vmatmul.mubr.f32.gmra.mxu0 %v297
        %v949 = vpop.f32.mrf.mxu0
        %v950 = vadd.f32 %v827, %v949
        %v951 = vpop.f32.mrf.mxu0
        %952 = vmatprep.mubr.f32.mxu0 0.0
        %953 = vmatmul.mubr.f32.gmra.mxu0 %v298
        %v954 = vpop.f32.mrf.mxu0
        %v955 = vadd.f32 %v827, %v954
        %v956 = vpop.f32.mrf.mxu0
        %957 = vmatprep.mubr.f32.mxu0 0.0
        %958 = vmatmul.mubr.f32.gmra.mxu0 %v299
        %v959 = vpop.f32.mrf.mxu0
        %v960 = vadd.f32 %v827, %v959
        %v961 = vpop.f32.mrf.mxu0
        %962 = vmatprep.mubr.f32.mxu0 0.0
        %963 = vmatmul.mubr.f32.gmra.mxu0 %v300
        %v964 = vpop.f32.mrf.mxu0
        %v965 = vadd.f32 %v827, %v964
        %v966 = vpop.f32.mrf.mxu0
        %967 = vmatprep.mubr.f32.mxu0 0.0
        %968 = vmatmul.mubr.f32.gmra.mxu0 %v301
        %v969 = vpop.f32.mrf.mxu0
        %v970 = vadd.f32 %v827, %v969
        %v971 = vpop.f32.mrf.mxu0
        %972 = vdwg.mxu0
        %v973 = vtanh.pop %v895
        %v974 = vtanh.pop %v900
        %v975 = vtanh.pop %v905
        %v976 = vtanh.pop %v910
        %v977 = vtanh.pop %v915
        %v978 = vtanh.pop %v920
        %v979 = vtanh.pop %v925
        %v980 = vtanh.pop %v930
        %v981 = vtanh.pop %v935
        %v982 = vtanh.pop %v940
        %v983 = vtanh.pop %v945
        %v984 = vtanh.pop %v950
        %v985 = vtanh.pop %v955
        %v986 = vtanh.pop %v960
        %v987 = vtanh.pop %v965
        %v988 = vtanh.pop %v970
        %s989 = scalar_lea.vmem [#allocation6], 128
        %v990 = vld [vmem:[%s989] sm:$0xf]
        %v991 = vld [vmem:[%s989 + $0x4] sm:$0xf]
        %v992 = vld [vmem:[%s989 + $0x8] sm:$0xf]
        %v993 = vld [vmem:[%s989 + $0xc] sm:$0xf]
        %v994 = vld [vmem:[%s989 + $0x10] sm:$0xf]
        %v995 = vld [vmem:[%s989 + $0x14] sm:$0xf]
        %v996 = vld [vmem:[%s989 + $0x18] sm:$0xf]
        %v997 = vld [vmem:[%s989 + $0x1c] sm:$0xf]
        %v998 = vld [vmem:[%s989 + $0x20] sm:$0xf]
        %v999 = vld [vmem:[%s989 + $0x24] sm:$0xf]
        %v1000 = vld [vmem:[%s989 + $0x28] sm:$0xf]
        %v1001 = vld [vmem:[%s989 + $0x2c] sm:$0xf]
        %v1002 = vld [vmem:[%s989 + $0x30] sm:$0xf]
        %v1003 = vld [vmem:[%s989 + $0x34] sm:$0xf]
        %v1004 = vld [vmem:[%s989 + $0x38] sm:$0xf]
        %v1005 = vld [vmem:[%s989 + $0x3c] sm:$0xf]
        %v1006 = vld [vmem:[#allocation7 + $0x2] sm:$0x1]
        %v1007 = vpack.c.bf16 %v974, %v973
        %v1008 = vpack.c.bf16 %v976, %v975
        %v1009 = vpack.c.bf16 %v978, %v977
        %v1010 = vpack.c.bf16 %v980, %v979
        %v1011 = vpack.c.bf16 %v982, %v981
        %v1012 = vpack.c.bf16 %v984, %v983
        %v1013 = vpack.c.bf16 %v986, %v985
        %v1014 = vpack.c.bf16 %v988, %v987
        %v1031 = vunpack.c.l.b16 %v990
        %v1032 = vunpack.c.l.b16 %v991
        %v1033 = vunpack.c.l.b16 %v992
        %v1034 = vunpack.c.l.b16 %v993
        %v1035 = vunpack.c.l.b16 %v994
        %v1036 = vunpack.c.l.b16 %v995
        %v1037 = vunpack.c.l.b16 %v996
        %v1038 = vunpack.c.l.b16 %v997
        %v1039 = vunpack.c.l.b16 %v998
        %v1040 = vunpack.c.l.b16 %v999
        %v1041 = vunpack.c.l.b16 %v1000
        %v1042 = vunpack.c.l.b16 %v1001
        %v1043 = vunpack.c.l.b16 %v1002
        %v1044 = vunpack.c.l.b16 %v1003
        %v1045 = vunpack.c.l.b16 %v1004
        %v1046 = vunpack.c.l.b16 %v1005
        %v1047 = vpack.c.b16 %v1032, %v1031
        %v1048 = vpack.c.b16 %v1034, %v1033
        %v1049 = vpack.c.b16 %v1036, %v1035
        %v1050 = vpack.c.b16 %v1038, %v1037
        %v1051 = vpack.c.b16 %v1040, %v1039
        %v1052 = vpack.c.b16 %v1042, %v1041
        %v1053 = vpack.c.b16 %v1044, %v1043
        %v1054 = vpack.c.b16 %v1046, %v1045
        %1063 = vmatprep.subr.bf16.mxu0 0
        %1064 = vmatpush1.bf16.msra.mxu0 %v1054
        %1065 = vmatprep.subr.bf16.mxu0 0
        %1066 = vmatpush1.bf16.msra.mxu0 %v1053
        %1067 = vmatprep.subr.bf16.mxu0 0
        %1068 = vmatpush1.bf16.msra.mxu0 %v1052
        %1069 = vmatprep.subr.bf16.mxu0 0
        %1070 = vmatpush1.bf16.msra.mxu0 %v1051
        %1071 = vmatprep.subr.bf16.mxu0 0
        %1072 = vmatpush1.bf16.msra.mxu0 %v1050
        %1073 = vmatprep.subr.bf16.mxu0 0
        %1074 = vmatpush1.bf16.msra.mxu0 %v1049
        %1075 = vmatprep.subr.bf16.mxu0 0
        %1076 = vmatpush1.bf16.msra.mxu0 %v1048
        %1077 = vmatprep.subr.bf16.mxu0 0
        %1078 = vmatpush1.bf16.msra.mxu0 %v1047
        %1079 = vmatprep.subr.bf16.mxu0 0
        %1080 = vmatpush2.bf16.msra.mxu0 0
        %1081 = vmatprep.subr.bf16.mxu0 0
        %1082 = vmatpush2.bf16.msra.mxu0 0
        %1083 = vmatprep.subr.bf16.mxu0 0
        %1084 = vmatpush2.bf16.msra.mxu0 0
        %1085 = vmatprep.subr.bf16.mxu0 0
        %1086 = vmatpush2.bf16.msra.mxu0 0
        %1087 = vmatprep.subr.bf16.mxu0 0
        %1088 = vmatpush2.bf16.msra.mxu0 0
        %1089 = vmatprep.subr.bf16.mxu0 0
        %1090 = vmatpush2.bf16.msra.mxu0 0
        %1091 = vmatprep.subr.bf16.mxu0 0
        %1092 = vmatpush2.bf16.msra.mxu0 0
        %1093 = vmatprep.subr.bf16.mxu0 0
        %1094 = vmatpush2.bf16.msra.mxu0 0
        %1095 = vmatprep.mubr.bf16.mxu0 0
        %1096 = vmatmul.mubr.bf16.gmra.mxu0 %v1007
        %v1097 = vpop.f32.mrf.mxu0
        %v1098 = vadd.f32 0.0, %v1097
        %v1099 = vpop.f32.mrf.mxu0
        %v1100 = vpop.f32.mrf.mxu0
        %v1101 = vadd.f32 0.0, %v1100
        %v1102 = vpop.f32.mrf.mxu0
        %1103 = vmatprep.mubr.bf16.mxu0 0
        %1104 = vmatmul.mubr.bf16.gmra.mxu0 %v1008
        %v1105 = vpop.f32.mrf.mxu0
        %v1106 = vadd.f32 0.0, %v1105
        %v1107 = vpop.f32.mrf.mxu0
        %v1108 = vpop.f32.mrf.mxu0
        %v1109 = vadd.f32 0.0, %v1108
        %v1110 = vpop.f32.mrf.mxu0
        %1111 = vmatprep.mubr.bf16.mxu0 0
        %1112 = vmatmul.mubr.bf16.gmra.mxu0 %v1009
        %v1113 = vpop.f32.mrf.mxu0
        %v1114 = vadd.f32 0.0, %v1113
        %v1115 = vpop.f32.mrf.mxu0
        %v1116 = vpop.f32.mrf.mxu0
        %v1117 = vadd.f32 0.0, %v1116
        %v1118 = vpop.f32.mrf.mxu0
        %1119 = vmatprep.mubr.bf16.mxu0 0
        %1120 = vmatmul.mubr.bf16.gmra.mxu0 %v1010
        %v1121 = vpop.f32.mrf.mxu0
        %v1122 = vadd.f32 0.0, %v1121
        %v1123 = vpop.f32.mrf.mxu0
        %v1124 = vpop.f32.mrf.mxu0
        %v1125 = vadd.f32 0.0, %v1124
        %v1126 = vpop.f32.mrf.mxu0
        %1127 = vmatprep.mubr.bf16.mxu0 0
        %1128 = vmatmul.mubr.bf16.gmra.mxu0 %v1011
        %v1129 = vpop.f32.mrf.mxu0
        %v1130 = vadd.f32 0.0, %v1129
        %v1131 = vpop.f32.mrf.mxu0
        %v1132 = vpop.f32.mrf.mxu0
        %v1133 = vadd.f32 0.0, %v1132
        %v1134 = vpop.f32.mrf.mxu0
        %1135 = vmatprep.mubr.bf16.mxu0 0
        %1136 = vmatmul.mubr.bf16.gmra.mxu0 %v1012
        %v1137 = vpop.f32.mrf.mxu0
        %v1138 = vadd.f32 0.0, %v1137
        %v1139 = vpop.f32.mrf.mxu0
        %v1140 = vpop.f32.mrf.mxu0
        %v1141 = vadd.f32 0.0, %v1140
        %v1142 = vpop.f32.mrf.mxu0
        %1143 = vmatprep.mubr.bf16.mxu0 0
        %1144 = vmatmul.mubr.bf16.gmra.mxu0 %v1013
        %v1145 = vpop.f32.mrf.mxu0
        %v1146 = vadd.f32 0.0, %v1145
        %v1147 = vpop.f32.mrf.mxu0
        %v1148 = vpop.f32.mrf.mxu0
        %v1149 = vadd.f32 0.0, %v1148
        %v1150 = vpop.f32.mrf.mxu0
        %1151 = vmatprep.mubr.bf16.mxu0 0
        %1152 = vmatmul.mubr.bf16.gmra.mxu0 %v1014
        %v1153 = vpop.f32.mrf.mxu0
        %v1154 = vadd.f32 0.0, %v1153
        %v1155 = vpop.f32.mrf.mxu0
        %v1156 = vpop.f32.mrf.mxu0
        %v1157 = vadd.f32 0.0, %v1156
        %v1158 = vpop.f32.mrf.mxu0
        %1159 = vdwg.mxu0
        %v1160 = vlaneseq
        %v1161 = vshrl.u32 %v1160, 7
        %v1162 = vsub.s32 0, %v1161
        %v1163 = vrot.slane %v1006, %v1162
        %1164 = vmatprep.subr.mxu0 0.0
        %1165 = vmatpush1.msra.mxu0 %v1157
        %1166 = vmatprep.subr.mxu0 0.0
        %1167 = vmatpush1.msra.mxu0 %v1154
        %1168 = vmatprep.subr.mxu0 0.0
        %1169 = vmatpush1.msra.mxu0 %v1149
        %1170 = vmatprep.subr.mxu0 0.0
        %1171 = vmatpush1.msra.mxu0 %v1146
        %1172 = vmatprep.subr.mxu0 0.0
        %1173 = vmatpush1.msra.mxu0 %v1141
        %1174 = vmatprep.subr.mxu0 0.0
        %1175 = vmatpush1.msra.mxu0 %v1138
        %1176 = vmatprep.subr.mxu0 0.0
        %1177 = vmatpush1.msra.mxu0 %v1133
        %1178 = vmatprep.subr.mxu0 0.0
        %1179 = vmatpush1.msra.mxu0 %v1130
        %1180 = vmatprep.subr.mxu0 0.0
        %1181 = vmatpush1.msra.mxu0 %v1125
        %1182 = vmatprep.subr.mxu0 0.0
        %1183 = vmatpush1.msra.mxu0 %v1122
        %1184 = vmatprep.subr.mxu0 0.0
        %1185 = vmatpush1.msra.mxu0 %v1117
        %1186 = vmatprep.subr.mxu0 0.0
        %1187 = vmatpush1.msra.mxu0 %v1114
        %1188 = vmatprep.subr.mxu0 0.0
        %1189 = vmatpush1.msra.mxu0 %v1109
        %1190 = vmatprep.subr.mxu0 0.0
        %1191 = vmatpush1.msra.mxu0 %v1106
        %1192 = vmatprep.subr.mxu0 0.0
        %1193 = vmatpush1.msra.mxu0 %v1101
        %1194 = vmatprep.subr.mxu0 0.0
        %1195 = vmatpush1.msra.mxu0 %v1098
        %1196 = vmatprep.subr.mxu0 0.0
        %1197 = vmatpush2.msra.mxu0 0.0
        %1198 = vmatprep.subr.mxu0 0.0
        %1199 = vmatpush2.msra.mxu0 0.0
        %1200 = vmatprep.subr.mxu0 0.0
        %1201 = vmatpush2.msra.mxu0 0.0
        %1202 = vmatprep.subr.mxu0 0.0
        %1203 = vmatpush2.msra.mxu0 0.0
        %1204 = vmatprep.subr.mxu0 0.0
        %1205 = vmatpush2.msra.mxu0 0.0
        %1206 = vmatprep.subr.mxu0 0.0
        %1207 = vmatpush2.msra.mxu0 0.0
        %1208 = vmatprep.subr.mxu0 0.0
        %1209 = vmatpush2.msra.mxu0 0.0
        %1210 = vmatprep.subr.mxu0 0.0
        %1211 = vmatpush2.msra.mxu0 0.0
        %1212 = vmatprep.subr.mxu0 0.0
        %1213 = vmatpush2.msra.mxu0 0.0
        %1214 = vmatprep.subr.mxu0 0.0
        %1215 = vmatpush2.msra.mxu0 0.0
        %1216 = vmatprep.subr.mxu0 0.0
        %1217 = vmatpush2.msra.mxu0 0.0
        %1218 = vmatprep.subr.mxu0 0.0
        %1219 = vmatpush2.msra.mxu0 0.0
        %1220 = vmatprep.subr.mxu0 0.0
        %1221 = vmatpush2.msra.mxu0 0.0
        %1222 = vmatprep.subr.mxu0 0.0
        %1223 = vmatpush2.msra.mxu0 0.0
        %1224 = vmatprep.subr.mxu0 0.0
        %1225 = vmatpush2.msra.mxu0 0.0
        %1226 = vmatprep.subr.mxu0 0.0
        %1227 = vmatpush2.msra.mxu0 0.0
        %1228 = vmatprep.mubr.f32.mxu0 0.0
        %1229 = vmatmul.mubr.f32.gmra.mxu0 %v286
        %v1230 = vpop.f32.mrf.mxu0
        %v1231 = vadd.f32 %v1163, %v1230
        %v1232 = vpop.f32.mrf.mxu0
        %1233 = vmatprep.mubr.f32.mxu0 0.0
        %1234 = vmatmul.mubr.f32.gmra.mxu0 %v287
        %v1235 = vpop.f32.mrf.mxu0
        %v1236 = vadd.f32 %v1163, %v1235
        %v1237 = vpop.f32.mrf.mxu0
        %1238 = vmatprep.mubr.f32.mxu0 0.0
        %1239 = vmatmul.mubr.f32.gmra.mxu0 %v288
        %v1240 = vpop.f32.mrf.mxu0
        %v1241 = vadd.f32 %v1163, %v1240
        %v1242 = vpop.f32.mrf.mxu0
        %1243 = vmatprep.mubr.f32.mxu0 0.0
        %1244 = vmatmul.mubr.f32.gmra.mxu0 %v289
        %v1245 = vpop.f32.mrf.mxu0
        %v1246 = vadd.f32 %v1163, %v1245
        %v1247 = vpop.f32.mrf.mxu0
        %1248 = vmatprep.mubr.f32.mxu0 0.0
        %1249 = vmatmul.mubr.f32.gmra.mxu0 %v290
        %v1250 = vpop.f32.mrf.mxu0
        %v1251 = vadd.f32 %v1163, %v1250
        %v1252 = vpop.f32.mrf.mxu0
        %1253 = vmatprep.mubr.f32.mxu0 0.0
        %1254 = vmatmul.mubr.f32.gmra.mxu0 %v291
        %v1255 = vpop.f32.mrf.mxu0
        %v1256 = vadd.f32 %v1163, %v1255
        %v1257 = vpop.f32.mrf.mxu0
        %1258 = vmatprep.mubr.f32.mxu0 0.0
        %1259 = vmatmul.mubr.f32.gmra.mxu0 %v292
        %v1260 = vpop.f32.mrf.mxu0
        %v1261 = vadd.f32 %v1163, %v1260
        %v1262 = vpop.f32.mrf.mxu0
        %1263 = vmatprep.mubr.f32.mxu0 0.0
        %1264 = vmatmul.mubr.f32.gmra.mxu0 %v293
        %v1265 = vpop.f32.mrf.mxu0
        %v1266 = vadd.f32 %v1163, %v1265
        %v1267 = vpop.f32.mrf.mxu0
        %1268 = vmatprep.mubr.f32.mxu0 0.0
        %1269 = vmatmul.mubr.f32.gmra.mxu0 %v294
        %v1270 = vpop.f32.mrf.mxu0
        %v1271 = vadd.f32 %v1163, %v1270
        %v1272 = vpop.f32.mrf.mxu0
        %1273 = vmatprep.mubr.f32.mxu0 0.0
        %1274 = vmatmul.mubr.f32.gmra.mxu0 %v295
        %v1275 = vpop.f32.mrf.mxu0
        %v1276 = vadd.f32 %v1163, %v1275
        %v1277 = vpop.f32.mrf.mxu0
        %1278 = vmatprep.mubr.f32.mxu0 0.0
        %1279 = vmatmul.mubr.f32.gmra.mxu0 %v296
        %v1280 = vpop.f32.mrf.mxu0
        %v1281 = vadd.f32 %v1163, %v1280
        %v1282 = vpop.f32.mrf.mxu0
        %1283 = vmatprep.mubr.f32.mxu0 0.0
        %1284 = vmatmul.mubr.f32.gmra.mxu0 %v297
        %v1285 = vpop.f32.mrf.mxu0
        %v1286 = vadd.f32 %v1163, %v1285
        %v1287 = vpop.f32.mrf.mxu0
        %1288 = vmatprep.mubr.f32.mxu0 0.0
        %1289 = vmatmul.mubr.f32.gmra.mxu0 %v298
        %v1290 = vpop.f32.mrf.mxu0
        %v1291 = vadd.f32 %v1163, %v1290
        %v1292 = vpop.f32.mrf.mxu0
        %1293 = vmatprep.mubr.f32.mxu0 0.0
        %1294 = vmatmul.mubr.f32.gmra.mxu0 %v299
        %v1295 = vpop.f32.mrf.mxu0
        %v1296 = vadd.f32 %v1163, %v1295
        %v1297 = vpop.f32.mrf.mxu0
        %1298 = vmatprep.mubr.f32.mxu0 0.0
        %1299 = vmatmul.mubr.f32.gmra.mxu0 %v300
        %v1300 = vpop.f32.mrf.mxu0
        %v1301 = vadd.f32 %v1163, %v1300
        %v1302 = vpop.f32.mrf.mxu0
        %1303 = vmatprep.mubr.f32.mxu0 0.0
        %1304 = vmatmul.mubr.f32.gmra.mxu0 %v301
        %v1305 = vpop.f32.mrf.mxu0
        %v1306 = vadd.f32 %v1163, %v1305
        %v1307 = vpop.f32.mrf.mxu0
        %1308 = vdwg.mxu0
        %v1309 = vtanh.pop %v1231
        %v1310 = vtanh.pop %v1236
        %v1311 = vtanh.pop %v1241
        %v1312 = vtanh.pop %v1246
        %v1313 = vtanh.pop %v1251
        %v1314 = vtanh.pop %v1256
        %v1315 = vtanh.pop %v1261
        %v1316 = vtanh.pop %v1266
        %v1317 = vtanh.pop %v1271
        %v1318 = vtanh.pop %v1276
        %v1319 = vtanh.pop %v1281
        %v1320 = vtanh.pop %v1286
        %v1321 = vtanh.pop %v1291
        %v1322 = vtanh.pop %v1296
        %v1323 = vtanh.pop %v1301
        %v1324 = vtanh.pop %v1306
        %s1325 = scalar_lea.vmem [#allocation6], 192
        %v1326 = vld [vmem:[%s1325] sm:$0xf]
        %v1327 = vld [vmem:[%s1325 + $0x4] sm:$0xf]
        %v1328 = vld [vmem:[%s1325 + $0x8] sm:$0xf]
        %v1329 = vld [vmem:[%s1325 + $0xc] sm:$0xf]
        %v1330 = vld [vmem:[%s1325 + $0x10] sm:$0xf]
        %v1331 = vld [vmem:[%s1325 + $0x14] sm:$0xf]
        %v1332 = vld [vmem:[%s1325 + $0x18] sm:$0xf]
        %v1333 = vld [vmem:[%s1325 + $0x1c] sm:$0xf]
        %v1334 = vld [vmem:[%s1325 + $0x20] sm:$0xf]
        %v1335 = vld [vmem:[%s1325 + $0x24] sm:$0xf]
        %v1336 = vld [vmem:[%s1325 + $0x28] sm:$0xf]
        %v1337 = vld [vmem:[%s1325 + $0x2c] sm:$0xf]
        %v1338 = vld [vmem:[%s1325 + $0x30] sm:$0xf]
        %v1339 = vld [vmem:[%s1325 + $0x34] sm:$0xf]
        %v1340 = vld [vmem:[%s1325 + $0x38] sm:$0xf]
        %v1341 = vld [vmem:[%s1325 + $0x3c] sm:$0xf]
        %v1342 = vld [vmem:[#allocation7 + $0x3] sm:$0x1]
        %v1343 = vpack.c.bf16 %v1310, %v1309
        %v1344 = vpack.c.bf16 %v1312, %v1311
        %v1345 = vpack.c.bf16 %v1314, %v1313
        %v1346 = vpack.c.bf16 %v1316, %v1315
        %v1347 = vpack.c.bf16 %v1318, %v1317
        %v1348 = vpack.c.bf16 %v1320, %v1319
        %v1349 = vpack.c.bf16 %v1322, %v1321
        %v1350 = vpack.c.bf16 %v1324, %v1323
        %v1367 = vunpack.c.l.b16 %v1326
        %v1368 = vunpack.c.l.b16 %v1327
        %v1369 = vunpack.c.l.b16 %v1328
        %v1370 = vunpack.c.l.b16 %v1329
        %v1371 = vunpack.c.l.b16 %v1330
        %v1372 = vunpack.c.l.b16 %v1331
        %v1373 = vunpack.c.l.b16 %v1332
        %v1374 = vunpack.c.l.b16 %v1333
        %v1375 = vunpack.c.l.b16 %v1334
        %v1376 = vunpack.c.l.b16 %v1335
        %v1377 = vunpack.c.l.b16 %v1336
        %v1378 = vunpack.c.l.b16 %v1337
        %v1379 = vunpack.c.l.b16 %v1338
        %v1380 = vunpack.c.l.b16 %v1339
        %v1381 = vunpack.c.l.b16 %v1340
        %v1382 = vunpack.c.l.b16 %v1341
        %v1383 = vpack.c.b16 %v1368, %v1367
        %v1384 = vpack.c.b16 %v1370, %v1369
        %v1385 = vpack.c.b16 %v1372, %v1371
        %v1386 = vpack.c.b16 %v1374, %v1373
        %v1387 = vpack.c.b16 %v1376, %v1375
        %v1388 = vpack.c.b16 %v1378, %v1377
        %v1389 = vpack.c.b16 %v1380, %v1379
        %v1390 = vpack.c.b16 %v1382, %v1381
        %1399 = vmatprep.subr.bf16.mxu0 0
        %1400 = vmatpush1.bf16.msra.mxu0 %v1390
        %1401 = vmatprep.subr.bf16.mxu0 0
        %1402 = vmatpush1.bf16.msra.mxu0 %v1389
        %1403 = vmatprep.subr.bf16.mxu0 0
        %1404 = vmatpush1.bf16.msra.mxu0 %v1388
        %1405 = vmatprep.subr.bf16.mxu0 0
        %1406 = vmatpush1.bf16.msra.mxu0 %v1387
        %1407 = vmatprep.subr.bf16.mxu0 0
        %1408 = vmatpush1.bf16.msra.mxu0 %v1386
        %1409 = vmatprep.subr.bf16.mxu0 0
        %1410 = vmatpush1.bf16.msra.mxu0 %v1385
        %1411 = vmatprep.subr.bf16.mxu0 0
        %1412 = vmatpush1.bf16.msra.mxu0 %v1384
        %1413 = vmatprep.subr.bf16.mxu0 0
        %1414 = vmatpush1.bf16.msra.mxu0 %v1383
        %1415 = vmatprep.subr.bf16.mxu0 0
        %1416 = vmatpush2.bf16.msra.mxu0 0
        %1417 = vmatprep.subr.bf16.mxu0 0
        %1418 = vmatpush2.bf16.msra.mxu0 0
        %1419 = vmatprep.subr.bf16.mxu0 0
        %1420 = vmatpush2.bf16.msra.mxu0 0
        %1421 = vmatprep.subr.bf16.mxu0 0
        %1422 = vmatpush2.bf16.msra.mxu0 0
        %1423 = vmatprep.subr.bf16.mxu0 0
        %1424 = vmatpush2.bf16.msra.mxu0 0
        %1425 = vmatprep.subr.bf16.mxu0 0
        %1426 = vmatpush2.bf16.msra.mxu0 0
        %1427 = vmatprep.subr.bf16.mxu0 0
        %1428 = vmatpush2.bf16.msra.mxu0 0
        %1429 = vmatprep.subr.bf16.mxu0 0
        %1430 = vmatpush2.bf16.msra.mxu0 0
        %1431 = vmatprep.mubr.bf16.mxu0 0
        %1432 = vmatmul.mubr.bf16.gmra.mxu0 %v1343
        %v1433 = vpop.f32.mrf.mxu0
        %v1434 = vadd.f32 0.0, %v1433
        %v1435 = vpop.f32.mrf.mxu0
        %v1436 = vpop.f32.mrf.mxu0
        %v1437 = vadd.f32 0.0, %v1436
        %v1438 = vpop.f32.mrf.mxu0
        %1439 = vmatprep.mubr.bf16.mxu0 0
        %1440 = vmatmul.mubr.bf16.gmra.mxu0 %v1344
        %v1441 = vpop.f32.mrf.mxu0
        %v1442 = vadd.f32 0.0, %v1441
        %v1443 = vpop.f32.mrf.mxu0
        %v1444 = vpop.f32.mrf.mxu0
        %v1445 = vadd.f32 0.0, %v1444
        %v1446 = vpop.f32.mrf.mxu0
        %1447 = vmatprep.mubr.bf16.mxu0 0
        %1448 = vmatmul.mubr.bf16.gmra.mxu0 %v1345
        %v1449 = vpop.f32.mrf.mxu0
        %v1450 = vadd.f32 0.0, %v1449
        %v1451 = vpop.f32.mrf.mxu0
        %v1452 = vpop.f32.mrf.mxu0
        %v1453 = vadd.f32 0.0, %v1452
        %v1454 = vpop.f32.mrf.mxu0
        %1455 = vmatprep.mubr.bf16.mxu0 0
        %1456 = vmatmul.mubr.bf16.gmra.mxu0 %v1346
        %v1457 = vpop.f32.mrf.mxu0
        %v1458 = vadd.f32 0.0, %v1457
        %v1459 = vpop.f32.mrf.mxu0
        %v1460 = vpop.f32.mrf.mxu0
        %v1461 = vadd.f32 0.0, %v1460
        %v1462 = vpop.f32.mrf.mxu0
        %1463 = vmatprep.mubr.bf16.mxu0 0
        %1464 = vmatmul.mubr.bf16.gmra.mxu0 %v1347
        %v1465 = vpop.f32.mrf.mxu0
        %v1466 = vadd.f32 0.0, %v1465
        %v1467 = vpop.f32.mrf.mxu0
        %v1468 = vpop.f32.mrf.mxu0
        %v1469 = vadd.f32 0.0, %v1468
        %v1470 = vpop.f32.mrf.mxu0
        %1471 = vmatprep.mubr.bf16.mxu0 0
        %1472 = vmatmul.mubr.bf16.gmra.mxu0 %v1348
        %v1473 = vpop.f32.mrf.mxu0
        %v1474 = vadd.f32 0.0, %v1473
        %v1475 = vpop.f32.mrf.mxu0
        %v1476 = vpop.f32.mrf.mxu0
        %v1477 = vadd.f32 0.0, %v1476
        %v1478 = vpop.f32.mrf.mxu0
        %1479 = vmatprep.mubr.bf16.mxu0 0
        %1480 = vmatmul.mubr.bf16.gmra.mxu0 %v1349
        %v1481 = vpop.f32.mrf.mxu0
        %v1482 = vadd.f32 0.0, %v1481
        %v1483 = vpop.f32.mrf.mxu0
        %v1484 = vpop.f32.mrf.mxu0
        %v1485 = vadd.f32 0.0, %v1484
        %v1486 = vpop.f32.mrf.mxu0
        %1487 = vmatprep.mubr.bf16.mxu0 0
        %1488 = vmatmul.mubr.bf16.gmra.mxu0 %v1350
        %v1489 = vpop.f32.mrf.mxu0
        %v1490 = vadd.f32 0.0, %v1489
        %v1491 = vpop.f32.mrf.mxu0
        %v1492 = vpop.f32.mrf.mxu0
        %v1493 = vadd.f32 0.0, %v1492
        %v1494 = vpop.f32.mrf.mxu0
        %1495 = vdwg.mxu0
        %v1496 = vlaneseq
        %v1497 = vshrl.u32 %v1496, 7
        %v1498 = vsub.s32 0, %v1497
        %v1499 = vrot.slane %v1342, %v1498
        %1500 = vmatprep.subr.mxu0 0.0
        %1501 = vmatpush1.msra.mxu0 %v1493
        %1502 = vmatprep.subr.mxu0 0.0
        %1503 = vmatpush1.msra.mxu0 %v1490
        %1504 = vmatprep.subr.mxu0 0.0
        %1505 = vmatpush1.msra.mxu0 %v1485
        %1506 = vmatprep.subr.mxu0 0.0
        %1507 = vmatpush1.msra.mxu0 %v1482
        %1508 = vmatprep.subr.mxu0 0.0
        %1509 = vmatpush1.msra.mxu0 %v1477
        %1510 = vmatprep.subr.mxu0 0.0
        %1511 = vmatpush1.msra.mxu0 %v1474
        %1512 = vmatprep.subr.mxu0 0.0
        %1513 = vmatpush1.msra.mxu0 %v1469
        %1514 = vmatprep.subr.mxu0 0.0
        %1515 = vmatpush1.msra.mxu0 %v1466
        %1516 = vmatprep.subr.mxu0 0.0
        %1517 = vmatpush1.msra.mxu0 %v1461
        %1518 = vmatprep.subr.mxu0 0.0
        %1519 = vmatpush1.msra.mxu0 %v1458
        %1520 = vmatprep.subr.mxu0 0.0
        %1521 = vmatpush1.msra.mxu0 %v1453
        %1522 = vmatprep.subr.mxu0 0.0
        %1523 = vmatpush1.msra.mxu0 %v1450
        %1524 = vmatprep.subr.mxu0 0.0
        %1525 = vmatpush1.msra.mxu0 %v1445
        %1526 = vmatprep.subr.mxu0 0.0
        %1527 = vmatpush1.msra.mxu0 %v1442
        %1528 = vmatprep.subr.mxu0 0.0
        %1529 = vmatpush1.msra.mxu0 %v1437
        %1530 = vmatprep.subr.mxu0 0.0
        %1531 = vmatpush1.msra.mxu0 %v1434
        %1532 = vmatprep.subr.mxu0 0.0
        %1533 = vmatpush2.msra.mxu0 0.0
        %1534 = vmatprep.subr.mxu0 0.0
        %1535 = vmatpush2.msra.mxu0 0.0
        %1536 = vmatprep.subr.mxu0 0.0
        %1537 = vmatpush2.msra.mxu0 0.0
        %1538 = vmatprep.subr.mxu0 0.0
        %1539 = vmatpush2.msra.mxu0 0.0
        %1540 = vmatprep.subr.mxu0 0.0
        %1541 = vmatpush2.msra.mxu0 0.0
        %1542 = vmatprep.subr.mxu0 0.0
        %1543 = vmatpush2.msra.mxu0 0.0
        %1544 = vmatprep.subr.mxu0 0.0
        %1545 = vmatpush2.msra.mxu0 0.0
        %1546 = vmatprep.subr.mxu0 0.0
        %1547 = vmatpush2.msra.mxu0 0.0
        %1548 = vmatprep.subr.mxu0 0.0
        %1549 = vmatpush2.msra.mxu0 0.0
        %1550 = vmatprep.subr.mxu0 0.0
        %1551 = vmatpush2.msra.mxu0 0.0
        %1552 = vmatprep.subr.mxu0 0.0
        %1553 = vmatpush2.msra.mxu0 0.0
        %1554 = vmatprep.subr.mxu0 0.0
        %1555 = vmatpush2.msra.mxu0 0.0
        %1556 = vmatprep.subr.mxu0 0.0
        %1557 = vmatpush2.msra.mxu0 0.0
        %1558 = vmatprep.subr.mxu0 0.0
        %1559 = vmatpush2.msra.mxu0 0.0
        %1560 = vmatprep.subr.mxu0 0.0
        %1561 = vmatpush2.msra.mxu0 0.0
        %1562 = vmatprep.subr.mxu0 0.0
        %1563 = vmatpush2.msra.mxu0 0.0
        %1564 = vmatprep.mubr.f32.mxu0 0.0
        %1565 = vmatmul.mubr.f32.gmra.mxu0 %v286
        %v1566 = vpop.f32.mrf.mxu0
        %v1567 = vadd.f32 %v1499, %v1566
        %v1568 = vpop.f32.mrf.mxu0
        %1569 = vmatprep.mubr.f32.mxu0 0.0
        %1570 = vmatmul.mubr.f32.gmra.mxu0 %v287
        %v1571 = vpop.f32.mrf.mxu0
        %v1572 = vadd.f32 %v1499, %v1571
        %v1573 = vpop.f32.mrf.mxu0
        %1574 = vmatprep.mubr.f32.mxu0 0.0
        %1575 = vmatmul.mubr.f32.gmra.mxu0 %v288
        %v1576 = vpop.f32.mrf.mxu0
        %v1577 = vadd.f32 %v1499, %v1576
        %v1578 = vpop.f32.mrf.mxu0
        %1579 = vmatprep.mubr.f32.mxu0 0.0
        %1580 = vmatmul.mubr.f32.gmra.mxu0 %v289
        %v1581 = vpop.f32.mrf.mxu0
        %v1582 = vadd.f32 %v1499, %v1581
        %v1583 = vpop.f32.mrf.mxu0
        %1584 = vmatprep.mubr.f32.mxu0 0.0
        %1585 = vmatmul.mubr.f32.gmra.mxu0 %v290
        %v1586 = vpop.f32.mrf.mxu0
        %v1587 = vadd.f32 %v1499, %v1586
        %v1588 = vpop.f32.mrf.mxu0
        %1589 = vmatprep.mubr.f32.mxu0 0.0
        %1590 = vmatmul.mubr.f32.gmra.mxu0 %v291
        %v1591 = vpop.f32.mrf.mxu0
        %v1592 = vadd.f32 %v1499, %v1591
        %v1593 = vpop.f32.mrf.mxu0
        %1594 = vmatprep.mubr.f32.mxu0 0.0
        %1595 = vmatmul.mubr.f32.gmra.mxu0 %v292
        %v1596 = vpop.f32.mrf.mxu0
        %v1597 = vadd.f32 %v1499, %v1596
        %v1598 = vpop.f32.mrf.mxu0
        %1599 = vmatprep.mubr.f32.mxu0 0.0
        %1600 = vmatmul.mubr.f32.gmra.mxu0 %v293
        %v1601 = vpop.f32.mrf.mxu0
        %v1602 = vadd.f32 %v1499, %v1601
        %v1603 = vpop.f32.mrf.mxu0
        %1604 = vmatprep.mubr.f32.mxu0 0.0
        %1605 = vmatmul.mubr.f32.gmra.mxu0 %v294
        %v1606 = vpop.f32.mrf.mxu0
        %v1607 = vadd.f32 %v1499, %v1606
        %v1608 = vpop.f32.mrf.mxu0
        %1609 = vmatprep.mubr.f32.mxu0 0.0
        %1610 = vmatmul.mubr.f32.gmra.mxu0 %v295
        %v1611 = vpop.f32.mrf.mxu0
        %v1612 = vadd.f32 %v1499, %v1611
        %v1613 = vpop.f32.mrf.mxu0
        %1614 = vmatprep.mubr.f32.mxu0 0.0
        %1615 = vmatmul.mubr.f32.gmra.mxu0 %v296
        %v1616 = vpop.f32.mrf.mxu0
        %v1617 = vadd.f32 %v1499, %v1616
        %v1618 = vpop.f32.mrf.mxu0
        %1619 = vmatprep.mubr.f32.mxu0 0.0
        %1620 = vmatmul.mubr.f32.gmra.mxu0 %v297
        %v1621 = vpop.f32.mrf.mxu0
        %v1622 = vadd.f32 %v1499, %v1621
        %v1623 = vpop.f32.mrf.mxu0
        %1624 = vmatprep.mubr.f32.mxu0 0.0
        %1625 = vmatmul.mubr.f32.gmra.mxu0 %v298
        %v1626 = vpop.f32.mrf.mxu0
        %v1627 = vadd.f32 %v1499, %v1626
        %v1628 = vpop.f32.mrf.mxu0
        %1629 = vmatprep.mubr.f32.mxu0 0.0
        %1630 = vmatmul.mubr.f32.gmra.mxu0 %v299
        %v1631 = vpop.f32.mrf.mxu0
        %v1632 = vadd.f32 %v1499, %v1631
        %v1633 = vpop.f32.mrf.mxu0
        %1634 = vmatprep.mubr.f32.mxu0 0.0
        %1635 = vmatmul.mubr.f32.gmra.mxu0 %v300
        %v1636 = vpop.f32.mrf.mxu0
        %v1637 = vadd.f32 %v1499, %v1636
        %v1638 = vpop.f32.mrf.mxu0
        %1639 = vmatprep.mubr.f32.mxu0 0.0
        %1640 = vmatmul.mubr.f32.gmra.mxu0 %v301
        %v1641 = vpop.f32.mrf.mxu0
        %v1642 = vadd.f32 %v1499, %v1641
        %v1643 = vpop.f32.mrf.mxu0
        %1644 = vdwg.mxu0
        %v1645 = vtanh.pop %v1567
        %v1646 = vtanh.pop %v1572
        %v1647 = vtanh.pop %v1577
        %v1648 = vtanh.pop %v1582
        %v1649 = vtanh.pop %v1587
        %v1650 = vtanh.pop %v1592
        %v1651 = vtanh.pop %v1597
        %v1652 = vtanh.pop %v1602
        %v1653 = vtanh.pop %v1607
        %v1654 = vtanh.pop %v1612
        %v1655 = vtanh.pop %v1617
        %v1656 = vtanh.pop %v1622
        %v1657 = vtanh.pop %v1627
        %v1658 = vtanh.pop %v1632
        %v1659 = vtanh.pop %v1637
        %v1660 = vtanh.pop %v1642
        %s1661 = scalar_lea.vmem [#allocation6], 256
        %v1662 = vld [vmem:[%s1661] sm:$0xf]
        %v1663 = vld [vmem:[%s1661 + $0x4] sm:$0xf]
        %v1664 = vld [vmem:[%s1661 + $0x8] sm:$0xf]
        %v1665 = vld [vmem:[%s1661 + $0xc] sm:$0xf]
        %v1666 = vld [vmem:[%s1661 + $0x10] sm:$0xf]
        %v1667 = vld [vmem:[%s1661 + $0x14] sm:$0xf]
        %v1668 = vld [vmem:[%s1661 + $0x18] sm:$0xf]
        %v1669 = vld [vmem:[%s1661 + $0x1c] sm:$0xf]
        %v1670 = vld [vmem:[%s1661 + $0x20] sm:$0xf]
        %v1671 = vld [vmem:[%s1661 + $0x24] sm:$0xf]
        %v1672 = vld [vmem:[%s1661 + $0x28] sm:$0xf]
        %v1673 = vld [vmem:[%s1661 + $0x2c] sm:$0xf]
        %v1674 = vld [vmem:[%s1661 + $0x30] sm:$0xf]
        %v1675 = vld [vmem:[%s1661 + $0x34] sm:$0xf]
        %v1676 = vld [vmem:[%s1661 + $0x38] sm:$0xf]
        %v1677 = vld [vmem:[%s1661 + $0x3c] sm:$0xf]
        %v1678 = vld [vmem:[#allocation7 + $0x4] sm:$0x1]
        %v1679 = vpack.c.bf16 %v1646, %v1645
        %v1680 = vpack.c.bf16 %v1648, %v1647
        %v1681 = vpack.c.bf16 %v1650, %v1649
        %v1682 = vpack.c.bf16 %v1652, %v1651
        %v1683 = vpack.c.bf16 %v1654, %v1653
        %v1684 = vpack.c.bf16 %v1656, %v1655
        %v1685 = vpack.c.bf16 %v1658, %v1657
        %v1686 = vpack.c.bf16 %v1660, %v1659
        %v1687 = vlaneseq
        %v1688 = vshrl.u32 %v1687, 7
        %v1689 = vsub.s32 0, %v1688
        %v1690 = vrot.slane %v1678, %v1689
        %v1707 = vunpack.c.l.b16 %v1662
        %v1708 = vunpack.c.l.b16 %v1663
        %v1709 = vunpack.c.l.b16 %v1664
        %v1710 = vunpack.c.l.b16 %v1665
        %v1711 = vunpack.c.l.b16 %v1666
        %v1712 = vunpack.c.l.b16 %v1667
        %v1713 = vunpack.c.l.b16 %v1668
        %v1714 = vunpack.c.l.b16 %v1669
        %v1715 = vunpack.c.l.b16 %v1670
        %v1716 = vunpack.c.l.b16 %v1671
        %v1717 = vunpack.c.l.b16 %v1672
        %v1718 = vunpack.c.l.b16 %v1673
        %v1719 = vunpack.c.l.b16 %v1674
        %v1720 = vunpack.c.l.b16 %v1675
        %v1721 = vunpack.c.l.b16 %v1676
        %v1722 = vunpack.c.l.b16 %v1677
        %v1723 = vpack.c.b16 %v1708, %v1707
        %v1724 = vpack.c.b16 %v1710, %v1709
        %v1725 = vpack.c.b16 %v1712, %v1711
        %v1726 = vpack.c.b16 %v1714, %v1713
        %v1727 = vpack.c.b16 %v1716, %v1715
        %v1728 = vpack.c.b16 %v1718, %v1717
        %v1729 = vpack.c.b16 %v1720, %v1719
        %v1730 = vpack.c.b16 %v1722, %v1721
        %1739 = vmatprep.subr.bf16.mxu0 0
        %1740 = vmatpush1.bf16.msra.mxu0 %v1730
        %1741 = vmatprep.subr.bf16.mxu0 0
        %1742 = vmatpush1.bf16.msra.mxu0 %v1729
        %1743 = vmatprep.subr.bf16.mxu0 0
        %1744 = vmatpush1.bf16.msra.mxu0 %v1728
        %1745 = vmatprep.subr.bf16.mxu0 0
        %1746 = vmatpush1.bf16.msra.mxu0 %v1727
        %1747 = vmatprep.subr.bf16.mxu0 0
        %1748 = vmatpush1.bf16.msra.mxu0 %v1726
        %1749 = vmatprep.subr.bf16.mxu0 0
        %1750 = vmatpush1.bf16.msra.mxu0 %v1725
        %1751 = vmatprep.subr.bf16.mxu0 0
        %1752 = vmatpush1.bf16.msra.mxu0 %v1724
        %1753 = vmatprep.subr.bf16.mxu0 0
        %1754 = vmatpush1.bf16.msra.mxu0 %v1723
        %1755 = vmatprep.subr.bf16.mxu0 0
        %1756 = vmatpush2.bf16.msra.mxu0 0
        %1757 = vmatprep.subr.bf16.mxu0 0
        %1758 = vmatpush2.bf16.msra.mxu0 0
        %1759 = vmatprep.subr.bf16.mxu0 0
        %1760 = vmatpush2.bf16.msra.mxu0 0
        %1761 = vmatprep.subr.bf16.mxu0 0
        %1762 = vmatpush2.bf16.msra.mxu0 0
        %1763 = vmatprep.subr.bf16.mxu0 0
        %1764 = vmatpush2.bf16.msra.mxu0 0
        %1765 = vmatprep.subr.bf16.mxu0 0
        %1766 = vmatpush2.bf16.msra.mxu0 0
        %1767 = vmatprep.subr.bf16.mxu0 0
        %1768 = vmatpush2.bf16.msra.mxu0 0
        %1769 = vmatprep.subr.bf16.mxu0 0
        %1770 = vmatpush2.bf16.msra.mxu0 0
        %1771 = vmatprep.mubr.bf16.mxu0 0
        %1772 = vmatmul.mubr.bf16.gmra.mxu0 %v1679
        %v1773 = vpop.f32.mrf.mxu0
        %v1774 = vadd.f32 %v1690, %v1773
        %v1775 = vpop.f32.mrf.mxu0
        %v1776 = vpop.f32.mrf.mxu0
        %v1777 = vadd.f32 %v1690, %v1776
        %v1778 = vpop.f32.mrf.mxu0
        %1779 = vmatprep.mubr.bf16.mxu0 0
        %1780 = vmatmul.mubr.bf16.gmra.mxu0 %v1680
        %v1781 = vpop.f32.mrf.mxu0
        %v1782 = vadd.f32 %v1690, %v1781
        %v1783 = vpop.f32.mrf.mxu0
        %v1784 = vpop.f32.mrf.mxu0
        %v1785 = vadd.f32 %v1690, %v1784
        %v1786 = vpop.f32.mrf.mxu0
        %1787 = vmatprep.mubr.bf16.mxu0 0
        %1788 = vmatmul.mubr.bf16.gmra.mxu0 %v1681
        %v1789 = vpop.f32.mrf.mxu0
        %v1790 = vadd.f32 %v1690, %v1789
        %v1791 = vpop.f32.mrf.mxu0
        %v1792 = vpop.f32.mrf.mxu0
        %v1793 = vadd.f32 %v1690, %v1792
        %v1794 = vpop.f32.mrf.mxu0
        %1795 = vmatprep.mubr.bf16.mxu0 0
        %1796 = vmatmul.mubr.bf16.gmra.mxu0 %v1682
        %v1797 = vpop.f32.mrf.mxu0
        %v1798 = vadd.f32 %v1690, %v1797
        %v1799 = vpop.f32.mrf.mxu0
        %v1800 = vpop.f32.mrf.mxu0
        %v1801 = vadd.f32 %v1690, %v1800
        %v1802 = vpop.f32.mrf.mxu0
        %1803 = vmatprep.mubr.bf16.mxu0 0
        %1804 = vmatmul.mubr.bf16.gmra.mxu0 %v1683
        %v1805 = vpop.f32.mrf.mxu0
        %v1806 = vadd.f32 %v1690, %v1805
        %v1807 = vpop.f32.mrf.mxu0
        %v1808 = vpop.f32.mrf.mxu0
        %v1809 = vadd.f32 %v1690, %v1808
        %v1810 = vpop.f32.mrf.mxu0
        %1811 = vmatprep.mubr.bf16.mxu0 0
        %1812 = vmatmul.mubr.bf16.gmra.mxu0 %v1684
        %v1813 = vpop.f32.mrf.mxu0
        %v1814 = vadd.f32 %v1690, %v1813
        %v1815 = vpop.f32.mrf.mxu0
        %v1816 = vpop.f32.mrf.mxu0
        %v1817 = vadd.f32 %v1690, %v1816
        %v1818 = vpop.f32.mrf.mxu0
        %1819 = vmatprep.mubr.bf16.mxu0 0
        %1820 = vmatmul.mubr.bf16.gmra.mxu0 %v1685
        %v1821 = vpop.f32.mrf.mxu0
        %v1822 = vadd.f32 %v1690, %v1821
        %v1823 = vpop.f32.mrf.mxu0
        %v1824 = vpop.f32.mrf.mxu0
        %v1825 = vadd.f32 %v1690, %v1824
        %v1826 = vpop.f32.mrf.mxu0
        %1827 = vmatprep.mubr.bf16.mxu0 0
        %1828 = vmatmul.mubr.bf16.gmra.mxu0 %v1686
        %v1829 = vpop.f32.mrf.mxu0
        %v1830 = vadd.f32 %v1690, %v1829
        %v1831 = vpop.f32.mrf.mxu0
        %v1832 = vpop.f32.mrf.mxu0
        %v1833 = vadd.f32 %v1690, %v1832
        %v1834 = vpop.f32.mrf.mxu0
        %1835 = vdwg.mxu0
        %1836 = vst [vmem:[%s284] sm:$0xff] %v1774
        %1837 = vst [vmem:[%s284 + $0x8] sm:$0xff] %v1777
        %1838 = vst [vmem:[%s284 + $0x10] sm:$0xff] %v1782
        %1839 = vst [vmem:[%s284 + $0x18] sm:$0xff] %v1785
        %1840 = vst [vmem:[%s284 + $0x20] sm:$0xff] %v1790
        %1841 = vst [vmem:[%s284 + $0x28] sm:$0xff] %v1793
        %1842 = vst [vmem:[%s284 + $0x30] sm:$0xff] %v1798
        %1843 = vst [vmem:[%s284 + $0x38] sm:$0xff] %v1801
        %1844 = vst [vmem:[%s284 + $0x40] sm:$0xff] %v1806
        %1845 = vst [vmem:[%s284 + $0x48] sm:$0xff] %v1809
        %1846 = vst [vmem:[%s284 + $0x50] sm:$0xff] %v1814
        %1847 = vst [vmem:[%s284 + $0x58] sm:$0xff] %v1817
        %1848 = vst [vmem:[%s284 + $0x60] sm:$0xff] %v1822
        %1849 = vst [vmem:[%s284 + $0x68] sm:$0xff] %v1825
        %1850 = vst [vmem:[%s284 + $0x70] sm:$0xff] %v1830
        %1851 = vst [vmem:[%s284 + $0x78] sm:$0xff] %v1833
        %p1852 = scmp.lt.s32.totalorder %s22, 1
        %s1853 = scalar_select %p1852, %s22, 1
        %s1854 = smul.addr %s1853, 16
        %s1855 = smul.addr %s1854, 8
        %s1856 = scalar_lea.vmem %s4, %s1855
        // Predicated region
        $region53: #{gcn_forward.1} parent=35 // pred_check
          %p1857 = pneg %p134
        $region54: #{gcn_forward.1} parent=35 // pred_check_branch
          %1859 = sbr.rel (%p1857) target = $region56
        $region55: #{gcn_forward.1} parent=35 // pred_region
          _
        $region56: #{gcn_forward.1} parent=35 // pred_fallthru
          _
      $region36: #{gcn_forward.1} parent=5 // pred_fallthru
        _
      %p1860 = scmp.le.s32.totalorder 2, %s17
      // Predicated region
      $region57: #{gcn_forward.1} parent=5 // pred_check
        %p1861 = pneg %p1860
      $region58: #{gcn_forward.1} parent=5 // pred_check_branch
        %1863 = sbr.rel (%p1861) target = $region60
      $region59: #{gcn_forward.1} parent=5 // pred_region
        %s1864 = ssub.s32 %s17, 2
        // Predicated region
        $region61: #{gcn_forward.1} parent=59 // pred_check
          %p1865 = pneg %p140
        $region62: #{gcn_forward.1} parent=59 // pred_check_branch
          %1867 = sbr.rel (%p1865) target = $region64
        $region63: #{gcn_forward.1} parent=59 // pred_region
          %p1868 = scmp.lt.s32.totalorder %s23, 1
          %s1869 = scalar_select %p1868, %s23, 1
          %s1870 = smul.addr %s1869, 16
          %s1871 = smul.addr %s1870, 8
          %s1872 = scalar_lea.vmem %s4, %s1871
        $region64: #{gcn_forward.1} parent=59 // pred_fallthru
          _
      $region60: #{gcn_forward.1} parent=5 // pred_fallthru
        _
    $region6: #{gcn_forward.1} parent=1 // loop_footer
      %s21 = sadd.s32 1, %s17
    $region7: #{gcn_forward.1} parent=1 // loop_footer_branch
      %16 = sbr.rel target = $region3
    $region8: #{gcn_forward.1} parent=1 // loop_exit
      _
    %1873 = vsyncpa [#allocation3], 1
    %s1874 = scalar_lea.sflag [#allocation3], 1
    %1875 = vsyncpa %s1874, 1
    %1876 = vsyncpa [#allocation5], 1
    %s1877 = scalar_lea.sflag [#allocation5], 1
    %1878 = vsyncpa %s1877, 1
    %1879 = vsyncpa [#allocation8], 1

</llo_original>
